<compile_context>
chip_gen: v7x
topology: tpu7x:2x2x1
jax: 0.10.0
libtpu: 0.0.40
codegen_flags: <defaults>
</compile_context>

<pallas_src>
import jax
import jax.numpy as jnp
from jax import lax
from jax.experimental import pallas as pl
from jax.experimental.pallas import tpu as pltpu


# ---------------------------------------------------------------------------
# Kernel: one batch element per grid point.  Fused QKV + RoPE + causal
# attention + output projection, writing a lane-dense (1, T, E) block.
# ---------------------------------------------------------------------------
def _mha_fused_kernel(x_ref, wqkv_ref, wproj_ref, bias_ref, cos_ref, sin_ref,
                      o_ref):
    T = x_ref.shape[1]
    E = o_ref.shape[2]
    hs = cos_ref.shape[1]          # head size
    Dh = wproj_ref.shape[0]        # H * hs
    H = Dh // hs
    half = hs // 2

    x = x_ref[0]                   # (T, E) bf16

    # Fused QKV projection for all heads: (T, E) @ (E, 3*Dh) -> (T, 3*Dh) f32.
    qkv = jnp.dot(x, wqkv_ref[...], preferred_element_type=jnp.float32)

    cos = cos_ref[...]             # (T, hs)  [cos | cos]
    sin = sin_ref[...]             # (T, hs)  [-sin | sin]  (sign folded in)

    # Causal mask (hoisted out of the head loop).
    rows = lax.broadcasted_iota(jnp.int32, (T, T), 0)
    cols = lax.broadcasted_iota(jnp.int32, (T, T), 1)
    causal = cols <= rows

    scale = hs ** (-0.5)
    acc = jnp.zeros((T, E), jnp.float32)   # projected output accumulator

    def rope(z):
        # z is in rotate-half (de-interleaved) layout: [real | imag].
        # rotate_half(z) = [-z_imag | z_real]; the minus sign lives in `sin`.
        z_rot = jnp.concatenate([z[:, half:], z[:, :half]], axis=-1)
        return z * cos + z_rot * sin

    for h in range(H):
        qh = qkv[:, h * hs:(h + 1) * hs]                       # (T, hs)
        kh = qkv[:, Dh + h * hs:Dh + (h + 1) * hs]             # (T, hs)
        vh = qkv[:, 2 * Dh + h * hs:2 * Dh + (h + 1) * hs]     # (T, hs)

        qh = rope(qh)
        kh = rope(kh)

        # scores = q @ k^T * hs^-0.5   (bf16 MXU inputs, f32 accumulation)
        s = lax.dot_general(qh.astype(jnp.bfloat16), kh.astype(jnp.bfloat16),
                            (((1,), (1,)), ((), ())),
                            preferred_element_type=jnp.float32) * scale
        s = jnp.where(causal, s, -1e30)

        m = jnp.max(s, axis=-1, keepdims=True)
        p = jnp.exp(s - m)
        l = jnp.sum(p, axis=-1, keepdims=True)

        # Normalize AFTER the PV matmul: (T, hs) mults + EUP reciprocal instead
        # of a (T, T) divide.
        oh = jnp.dot(p.astype(jnp.bfloat16), vh.astype(jnp.bfloat16),
                     preferred_element_type=jnp.float32)
        oh = oh * pl.reciprocal(l, approx=True)

        # Fused output projection, accumulated per head into a lane-dense
        # (T, E) slab: acc += oh @ W_proj[h*hs:(h+1)*hs, :].
        acc = acc + jnp.dot(oh.astype(jnp.bfloat16),
                            wproj_ref[h * hs:(h + 1) * hs, :],
                            preferred_element_type=jnp.float32)

    o_ref[0] = (acc + bias_ref[...]).astype(o_ref.dtype)


# ---------------------------------------------------------------------------
# One-time parameter packing (hoisted out of the forward pass).
# ---------------------------------------------------------------------------
def prepare_mha_params(wq, wk, wv, w_proj, b_proj, cos_h, sin_h):
    """
    wq/wk/wv : (H, hs, E)  per-head Linear weights (torch out_features x in_features)
    w_proj   : (E, H*hs)   projection weight (torch layout)
    b_proj   : (E,)
    cos_h/sin_h : (T, hs//2)  RoPE cos/sin of the rotation angles
    """
    H, hs, E = wq.shape

    # De-interleave the Q/K output features into rotate-half layout:
    # new order = [0, 2, 4, ..., 1, 3, 5, ...]  (reals first, then imags).
    perm = jnp.concatenate([jnp.arange(0, hs, 2), jnp.arange(1, hs, 2)])
    wq_f = jnp.transpose(wq[:, perm, :], (2, 0, 1)).reshape(E, H * hs)
    wk_f = jnp.transpose(wk[:, perm, :], (2, 0, 1)).reshape(E, H * hs)
    # V keeps the original (torch) per-head ordering so the concat/projection
    # layout matches the reference module exactly.
    wv_f = jnp.transpose(wv, (2, 0, 1)).reshape(E, H * hs)

    wqkv = jnp.concatenate([wq_f, wk_f, wv_f], axis=-1).astype(jnp.bfloat16)
    wproj_t = jnp.transpose(w_proj, (1, 0)).astype(jnp.bfloat16)     # (H*hs, E)
    bias = b_proj.reshape(1, -1).astype(jnp.float32)                 # (1, E)

    # Rotate-half RoPE tables; the sign of the rotation is folded into sin.
    cos = jnp.concatenate([cos_h, cos_h], axis=-1).astype(jnp.float32)   # (T, hs)
    sin = jnp.concatenate([-sin_h, sin_h], axis=-1).astype(jnp.float32)  # (T, hs)
    return wqkv, wproj_t, bias, cos, sin


# ---------------------------------------------------------------------------
# Forward wrapper
# ---------------------------------------------------------------------------
def multi_head_attention(x, wqkv, wproj_t, bias, cos, sin):
    B, T, E = x.shape
    Dh = wproj_t.shape[0]
    hs = cos.shape[1]

    x_bf = x.astype(jnp.bfloat16)

    return pl.pallas_call(
        _mha_fused_kernel,
        out_shape=jax.ShapeDtypeStruct((B, T, E), jnp.float32),
        grid_spec=pltpu.PrefetchScalarGridSpec(
            num_scalar_prefetch=0,
            grid=(B,),
            in_specs=[
                pl.BlockSpec((1, T, E), lambda b: (b, 0, 0)),      # x
                pl.BlockSpec((E, 3 * Dh), lambda b: (0, 0)),       # W_qkv
                pl.BlockSpec((Dh, E), lambda b: (0, 0)),           # W_proj^T
                pl.BlockSpec((1, E), lambda b: (0, 0)),            # bias
                pl.BlockSpec((T, hs), lambda b: (0, 0)),           # cos
                pl.BlockSpec((T, hs), lambda b: (0, 0)),           # sin (signed)
            ],
            out_specs=pl.BlockSpec((1, T, E), lambda b: (b, 0, 0)),
        ),
        compiler_params=pltpu.CompilerParams(
            dimension_semantics=("parallel",)),
    )(x_bf, wqkv, wproj_t, bias, cos, sin)


# ---------------------------------------------------------------------------
# Pure-JAX reference (mirrors the PyTorch forward semantics, eval mode)
# ---------------------------------------------------------------------------
def _rope_ref(x, cos_h, sin_h):
    xe = x[..., 0::2]
    xo = x[..., 1::2]
    re = xe * cos_h - xo * sin_h
    ro = xe * sin_h + xo * cos_h
    return jnp.stack([re, ro], axis=-1).reshape(x.shape)


def ref_forward(x, wq, wk, wv, w_proj, b_proj, cos_h, sin_h):
    B, T, E = x.shape
    H, hs, _ = wq.shape
    outs = []
    for h in range(H):
        q = x @ wq[h].T
        k = x @ wk[h].T
        v = x @ wv[h].T
        q = _rope_ref(q, cos_h, sin_h)
        k = _rope_ref(k, cos_h, sin_h)
        s = (q @ jnp.swapaxes(k, -1, -2)) * hs ** (-0.5)
        mask = jnp.tril(jnp.ones((T, T)))
        s = jnp.where(mask == 0, -jnp.inf, s)
        w = jax.nn.softmax(s, axis=-1)
        outs.append(w @ v)
    cat = jnp.concatenate(outs, axis=-1)
    return cat @ w_proj.T + b_proj


# ---------------------------------------------------------------------------
if __name__ == "__main__":
    B, T, E = 2, 8, 32
    H, hs = 4, 8                # head_size * num_heads == embedding_size
    block_size = 16             # max precomputed RoPE length
    base_frequency = 10000.0

    key = jax.random.PRNGKey(0)
    kx, k1, k2, k3, k4, k5 = jax.random.split(key, 6)

    x = jax.random.normal(kx, (B, T, E), dtype=jnp.float32)
    wq = jax.random.normal(k1, (H, hs, E), dtype=jnp.float32) * 0.05
    wk = jax.random.normal(k2, (H, hs, E), dtype=jnp.float32) * 0.05
    wv = jax.random.normal(k3, (H, hs, E), dtype=jnp.float32) * 0.05
    w_proj = jax.random.normal(k4, (E, H * hs), dtype=jnp.float32) * 0.05
    b_proj = jax.random.normal(k5, (E,), dtype=jnp.float32) * 0.05

    # RoPE tables (precompute block_size positions, slice first T — as in the module)
    half = hs // 2
    inv_freq = 1.0 / (base_frequency ** (2.0 * jnp.arange(half, dtype=jnp.float32) / hs))
    pos = jnp.arange(block_size, dtype=jnp.float32)
    angles = jnp.outer(pos, inv_freq)[:T]                 # (T, hs//2)
    cos_h, sin_h = jnp.cos(angles), jnp.sin(angles)

    # One-time parameter packing (transposes, head de-interleave, bf16 cast).
    wqkv, wproj_t, bias, cos, sin = prepare_mha_params(
        wq, wk, wv, w_proj, b_proj, cos_h, sin_h)

    out = multi_head_attention(x, wqkv, wproj_t, bias, cos, sin)
    out = jax.block_until_ready(out)

    ref = ref_forward(x, wq, wk, wv, w_proj, b_proj, cos_h, sin_h)
    assert out.shape == (B, T, E)
    assert jnp.allclose(out, ref, rtol=2e-2, atol=2e-2), (
        f"max abs err = {jnp.max(jnp.abs(out - ref))}")

    print("KERNEL_OK")
</pallas_src>

<mosaic_0001>
module attributes {stable_mosaic.version = 11 : i64} {
  func.func @_mha_fused_kernel(%arg0: i32, %arg1: memref<1x8x32xbf16, #tpu.memory_space<vmem>>, %arg2: memref<32x96xbf16, #tpu.memory_space<vmem>>, %arg3: memref<32x32xbf16, #tpu.memory_space<vmem>>, %arg4: memref<1x32xf32, #tpu.memory_space<vmem>>, %arg5: memref<8x8xf32, #tpu.memory_space<vmem>>, %arg6: memref<8x8xf32, #tpu.memory_space<vmem>>, %arg7: memref<1x8x32xf32, #tpu.memory_space<vmem>>) attributes {dimension_semantics = [#tpu.dimension_semantics<parallel>], iteration_bounds = array<i64: 2>, scalar_prefetch = 0 : i64, scratch_operands = 0 : i64, tpu.core_type = #tpu.core_type<tc>, window_params = [{transform_indices = @transform_0, window_bounds = array<i64: 1, 8, 32>}, {pipeline_mode = #tpu.pipeline_mode<synchronous>, transform_indices = @transform_1, window_bounds = array<i64: 32, 96>}, {pipeline_mode = #tpu.pipeline_mode<synchronous>, transform_indices = @transform_2, window_bounds = array<i64: 32, 32>}, {pipeline_mode = #tpu.pipeline_mode<synchronous>, transform_indices = @transform_3, window_bounds = array<i64: 1, 32>}, {pipeline_mode = #tpu.pipeline_mode<synchronous>, transform_indices = @transform_4, window_bounds = array<i64: 8, 8>}, {pipeline_mode = #tpu.pipeline_mode<synchronous>, transform_indices = @transform_5, window_bounds = array<i64: 8, 8>}, {transform_indices = @transform_6, window_bounds = array<i64: 1, 8, 32>}]} {
    %c0 = arith.constant 0 : index
    %c0_0 = arith.constant 0 : index
    %c0_1 = arith.constant 0 : index
    %0 = vector.load %arg1[%c0, %c0_0, %c0_1] : memref<1x8x32xbf16, #tpu.memory_space<vmem>>, vector<1x8x32xbf16>
    %1 = vector.shape_cast %0 : vector<1x8x32xbf16> to vector<8x32xbf16>
    %c0_2 = arith.constant 0 : index
    %c0_3 = arith.constant 0 : index
    %2 = vector.load %arg2[%c0_2, %c0_3] : memref<32x96xbf16, #tpu.memory_space<vmem>>, vector<32x96xbf16>
    %cst = arith.constant dense<0.000000e+00> : vector<8x96xf32>
    %3 = tpu.matmul %1, %2, %cst {dimension_numbers = #tpu.dot_dimension_numbers<[1], [0], [0], [1], [0, 0, 1, 1], [], []>} : vector<8x32xbf16>, vector<32x96xbf16>, vector<8x96xf32> -> vector<8x96xf32>
    %c0_4 = arith.constant 0 : index
    %c0_5 = arith.constant 0 : index
    %4 = vector.load %arg5[%c0_4, %c0_5] : memref<8x8xf32, #tpu.memory_space<vmem>>, vector<8x8xf32>
    %c0_6 = arith.constant 0 : index
    %c0_7 = arith.constant 0 : index
    %5 = vector.load %arg6[%c0_6, %c0_7] : memref<8x8xf32, #tpu.memory_space<vmem>>, vector<8x8xf32>
    %6 = tpu.iota {dimensions = array<i32: 0>} : vector<8x8xi32>
    %7 = tpu.iota {dimensions = array<i32: 1>} : vector<8x8xi32>
    %8 = arith.cmpi sle, %7, %6 : vector<8x8xi32>
    %cst_8 = arith.constant 0.000000e+00 : f32
    %9 = vector.broadcast %cst_8 : f32 to vector<8x32xf32>
    %10 = vector.extract_strided_slice %3 {offsets = [0, 0], sizes = [8, 8], strides = [1, 1]} : vector<8x96xf32> to vector<8x8xf32>
    %11 = vector.extract_strided_slice %3 {offsets = [0, 32], sizes = [8, 8], strides = [1, 1]} : vector<8x96xf32> to vector<8x8xf32>
    %12 = vector.extract_strided_slice %3 {offsets = [0, 64], sizes = [8, 8], strides = [1, 1]} : vector<8x96xf32> to vector<8x8xf32>
    %13 = vector.extract_strided_slice %10 {offsets = [0, 4], sizes = [8, 4], strides = [1, 1]} : vector<8x8xf32> to vector<8x4xf32>
    %14 = vector.extract_strided_slice %10 {offsets = [0, 0], sizes = [8, 4], strides = [1, 1]} : vector<8x8xf32> to vector<8x4xf32>
    %15 = tpu.concatenate %13, %14 in 1 : vector<8x4xf32>, vector<8x4xf32> -> vector<8x8xf32>
    %16 = arith.mulf %10, %4 : vector<8x8xf32>
    %17 = arith.mulf %15, %5 : vector<8x8xf32>
    %18 = arith.addf %16, %17 : vector<8x8xf32>
    %19 = vector.extract_strided_slice %11 {offsets = [0, 4], sizes = [8, 4], strides = [1, 1]} : vector<8x8xf32> to vector<8x4xf32>
    %20 = vector.extract_strided_slice %11 {offsets = [0, 0], sizes = [8, 4], strides = [1, 1]} : vector<8x8xf32> to vector<8x4xf32>
    %21 = tpu.concatenate %19, %20 in 1 : vector<8x4xf32>, vector<8x4xf32> -> vector<8x8xf32>
    %22 = arith.mulf %11, %4 : vector<8x8xf32>
    %23 = arith.mulf %21, %5 : vector<8x8xf32>
    %24 = arith.addf %22, %23 : vector<8x8xf32>
    %25 = arith.truncf %18 : vector<8x8xf32> to vector<8x8xbf16>
    %26 = arith.truncf %24 : vector<8x8xf32> to vector<8x8xbf16>
    %cst_9 = arith.constant dense<0.000000e+00> : vector<8x8xf32>
    %27 = tpu.matmul %25, %26, %cst_9 {dimension_numbers = #tpu.dot_dimension_numbers<[1], [1], [0], [0], [0, 0, 1, 0], [], []>} : vector<8x8xbf16>, vector<8x8xbf16>, vector<8x8xf32> -> vector<8x8xf32>
    %cst_10 = arith.constant 0.353553385 : f32
    %28 = vector.broadcast %cst_10 : f32 to vector<8x8xf32>
    %29 = arith.mulf %27, %28 : vector<8x8xf32>
    %cst_11 = arith.constant -1.000000e+30 : f32
    %30 = vector.broadcast %cst_11 : f32 to vector<8x8xf32>
    %31 = arith.select %8, %29, %30 : vector<8x8xi1>, vector<8x8xf32>
    %cst_12 = arith.constant dense<0xFF800000> : vector<8xf32>
    %32 = vector.multi_reduction <maximumf>, %31, %cst_12 [1] : vector<8x8xf32> to vector<8xf32>
    %33 = vector.shape_cast %32 : vector<8xf32> to vector<8x1xf32>
    %34 = vector.broadcast %33 : vector<8x1xf32> to vector<8x8xf32>
    %35 = arith.subf %31, %34 : vector<8x8xf32>
    %36 = math.exp %35 : vector<8x8xf32>
    %cst_13 = arith.constant dense<0.000000e+00> : vector<8xf32>
    %37 = vector.multi_reduction <add>, %36, %cst_13 [1] : vector<8x8xf32> to vector<8xf32>
    %38 = vector.shape_cast %37 : vector<8xf32> to vector<8x1xf32>
    %39 = arith.truncf %36 : vector<8x8xf32> to vector<8x8xbf16>
    %40 = arith.truncf %12 : vector<8x8xf32> to vector<8x8xbf16>
    %cst_14 = arith.constant dense<0.000000e+00> : vector<8x8xf32>
    %41 = tpu.matmul %39, %40, %cst_14 {dimension_numbers = #tpu.dot_dimension_numbers<[1], [0], [0], [1], [0, 0, 1, 1], [], []>} : vector<8x8xbf16>, vector<8x8xbf16>, vector<8x8xf32> -> vector<8x8xf32>
    %42 = tpu.reciprocal %38 {approx = true} : vector<8x1xf32> -> vector<8x1xf32>
    %43 = vector.broadcast %42 : vector<8x1xf32> to vector<8x8xf32>
    %44 = arith.mulf %41, %43 : vector<8x8xf32>
    %45 = arith.truncf %44 : vector<8x8xf32> to vector<8x8xbf16>
    %c0_15 = arith.constant 0 : index
    %c0_16 = arith.constant 0 : index
    %46 = vector.load %arg3[%c0_15, %c0_16] : memref<32x32xbf16, #tpu.memory_space<vmem>>, vector<8x32xbf16>
    %cst_17 = arith.constant dense<0.000000e+00> : vector<8x32xf32>
    %47 = tpu.matmul %45, %46, %cst_17 {dimension_numbers = #tpu.dot_dimension_numbers<[1], [0], [0], [1], [0, 0, 1, 1], [], []>} : vector<8x8xbf16>, vector<8x32xbf16>, vector<8x32xf32> -> vector<8x32xf32>
    %48 = arith.addf %9, %47 : vector<8x32xf32>
    %49 = vector.extract_strided_slice %3 {offsets = [0, 8], sizes = [8, 8], strides = [1, 1]} : vector<8x96xf32> to vector<8x8xf32>
    %50 = vector.extract_strided_slice %3 {offsets = [0, 40], sizes = [8, 8], strides = [1, 1]} : vector<8x96xf32> to vector<8x8xf32>
    %51 = vector.extract_strided_slice %3 {offsets = [0, 72], sizes = [8, 8], strides = [1, 1]} : vector<8x96xf32> to vector<8x8xf32>
    %52 = vector.extract_strided_slice %49 {offsets = [0, 4], sizes = [8, 4], strides = [1, 1]} : vector<8x8xf32> to vector<8x4xf32>
    %53 = vector.extract_strided_slice %49 {offsets = [0, 0], sizes = [8, 4], strides = [1, 1]} : vector<8x8xf32> to vector<8x4xf32>
    %54 = tpu.concatenate %52, %53 in 1 : vector<8x4xf32>, vector<8x4xf32> -> vector<8x8xf32>
    %55 = arith.mulf %49, %4 : vector<8x8xf32>
    %56 = arith.mulf %54, %5 : vector<8x8xf32>
    %57 = arith.addf %55, %56 : vector<8x8xf32>
    %58 = vector.extract_strided_slice %50 {offsets = [0, 4], sizes = [8, 4], strides = [1, 1]} : vector<8x8xf32> to vector<8x4xf32>
    %59 = vector.extract_strided_slice %50 {offsets = [0, 0], sizes = [8, 4], strides = [1, 1]} : vector<8x8xf32> to vector<8x4xf32>
    %60 = tpu.concatenate %58, %59 in 1 : vector<8x4xf32>, vector<8x4xf32> -> vector<8x8xf32>
    %61 = arith.mulf %50, %4 : vector<8x8xf32>
    %62 = arith.mulf %60, %5 : vector<8x8xf32>
    %63 = arith.addf %61, %62 : vector<8x8xf32>
    %64 = arith.truncf %57 : vector<8x8xf32> to vector<8x8xbf16>
    %65 = arith.truncf %63 : vector<8x8xf32> to vector<8x8xbf16>
    %cst_18 = arith.constant dense<0.000000e+00> : vector<8x8xf32>
    %66 = tpu.matmul %64, %65, %cst_18 {dimension_numbers = #tpu.dot_dimension_numbers<[1], [1], [0], [0], [0, 0, 1, 0], [], []>} : vector<8x8xbf16>, vector<8x8xbf16>, vector<8x8xf32> -> vector<8x8xf32>
    %cst_19 = arith.constant 0.353553385 : f32
    %67 = vector.broadcast %cst_19 : f32 to vector<8x8xf32>
    %68 = arith.mulf %66, %67 : vector<8x8xf32>
    %cst_20 = arith.constant -1.000000e+30 : f32
    %69 = vector.broadcast %cst_20 : f32 to vector<8x8xf32>
    %70 = arith.select %8, %68, %69 : vector<8x8xi1>, vector<8x8xf32>
    %cst_21 = arith.constant dense<0xFF800000> : vector<8xf32>
    %71 = vector.multi_reduction <maximumf>, %70, %cst_21 [1] : vector<8x8xf32> to vector<8xf32>
    %72 = vector.shape_cast %71 : vector<8xf32> to vector<8x1xf32>
    %73 = vector.broadcast %72 : vector<8x1xf32> to vector<8x8xf32>
    %74 = arith.subf %70, %73 : vector<8x8xf32>
    %75 = math.exp %74 : vector<8x8xf32>
    %cst_22 = arith.constant dense<0.000000e+00> : vector<8xf32>
    %76 = vector.multi_reduction <add>, %75, %cst_22 [1] : vector<8x8xf32> to vector<8xf32>
    %77 = vector.shape_cast %76 : vector<8xf32> to vector<8x1xf32>
    %78 = arith.truncf %75 : vector<8x8xf32> to vector<8x8xbf16>
    %79 = arith.truncf %51 : vector<8x8xf32> to vector<8x8xbf16>
    %cst_23 = arith.constant dense<0.000000e+00> : vector<8x8xf32>
    %80 = tpu.matmul %78, %79, %cst_23 {dimension_numbers = #tpu.dot_dimension_numbers<[1], [0], [0], [1], [0, 0, 1, 1], [], []>} : vector<8x8xbf16>, vector<8x8xbf16>, vector<8x8xf32> -> vector<8x8xf32>
    %81 = tpu.reciprocal %77 {approx = true} : vector<8x1xf32> -> vector<8x1xf32>
    %82 = vector.broadcast %81 : vector<8x1xf32> to vector<8x8xf32>
    %83 = arith.mulf %80, %82 : vector<8x8xf32>
    %84 = arith.truncf %83 : vector<8x8xf32> to vector<8x8xbf16>
    %c8 = arith.constant 8 : index
    %c0_24 = arith.constant 0 : index
    %85 = vector.load %arg3[%c8, %c0_24] : memref<32x32xbf16, #tpu.memory_space<vmem>>, vector<8x32xbf16>
    %cst_25 = arith.constant dense<0.000000e+00> : vector<8x32xf32>
    %86 = tpu.matmul %84, %85, %cst_25 {dimension_numbers = #tpu.dot_dimension_numbers<[1], [0], [0], [1], [0, 0, 1, 1], [], []>} : vector<8x8xbf16>, vector<8x32xbf16>, vector<8x32xf32> -> vector<8x32xf32>
    %87 = arith.addf %48, %86 : vector<8x32xf32>
    %88 = vector.extract_strided_slice %3 {offsets = [0, 16], sizes = [8, 8], strides = [1, 1]} : vector<8x96xf32> to vector<8x8xf32>
    %89 = vector.extract_strided_slice %3 {offsets = [0, 48], sizes = [8, 8], strides = [1, 1]} : vector<8x96xf32> to vector<8x8xf32>
    %90 = vector.extract_strided_slice %3 {offsets = [0, 80], sizes = [8, 8], strides = [1, 1]} : vector<8x96xf32> to vector<8x8xf32>
    %91 = vector.extract_strided_slice %88 {offsets = [0, 4], sizes = [8, 4], strides = [1, 1]} : vector<8x8xf32> to vector<8x4xf32>
    %92 = vector.extract_strided_slice %88 {offsets = [0, 0], sizes = [8, 4], strides = [1, 1]} : vector<8x8xf32> to vector<8x4xf32>
    %93 = tpu.concatenate %91, %92 in 1 : vector<8x4xf32>, vector<8x4xf32> -> vector<8x8xf32>
    %94 = arith.mulf %88, %4 : vector<8x8xf32>
    %95 = arith.mulf %93, %5 : vector<8x8xf32>
    %96 = arith.addf %94, %95 : vector<8x8xf32>
    %97 = vector.extract_strided_slice %89 {offsets = [0, 4], sizes = [8, 4], strides = [1, 1]} : vector<8x8xf32> to vector<8x4xf32>
    %98 = vector.extract_strided_slice %89 {offsets = [0, 0], sizes = [8, 4], strides = [1, 1]} : vector<8x8xf32> to vector<8x4xf32>
    %99 = tpu.concatenate %97, %98 in 1 : vector<8x4xf32>, vector<8x4xf32> -> vector<8x8xf32>
    %100 = arith.mulf %89, %4 : vector<8x8xf32>
    %101 = arith.mulf %99, %5 : vector<8x8xf32>
    %102 = arith.addf %100, %101 : vector<8x8xf32>
    %103 = arith.truncf %96 : vector<8x8xf32> to vector<8x8xbf16>
    %104 = arith.truncf %102 : vector<8x8xf32> to vector<8x8xbf16>
    %cst_26 = arith.constant dense<0.000000e+00> : vector<8x8xf32>
    %105 = tpu.matmul %103, %104, %cst_26 {dimension_numbers = #tpu.dot_dimension_numbers<[1], [1], [0], [0], [0, 0, 1, 0], [], []>} : vector<8x8xbf16>, vector<8x8xbf16>, vector<8x8xf32> -> vector<8x8xf32>
    %cst_27 = arith.constant 0.353553385 : f32
    %106 = vector.broadcast %cst_27 : f32 to vector<8x8xf32>
    %107 = arith.mulf %105, %106 : vector<8x8xf32>
    %cst_28 = arith.constant -1.000000e+30 : f32
    %108 = vector.broadcast %cst_28 : f32 to vector<8x8xf32>
    %109 = arith.select %8, %107, %108 : vector<8x8xi1>, vector<8x8xf32>
    %cst_29 = arith.constant dense<0xFF800000> : vector<8xf32>
    %110 = vector.multi_reduction <maximumf>, %109, %cst_29 [1] : vector<8x8xf32> to vector<8xf32>
    %111 = vector.shape_cast %110 : vector<8xf32> to vector<8x1xf32>
    %112 = vector.broadcast %111 : vector<8x1xf32> to vector<8x8xf32>
    %113 = arith.subf %109, %112 : vector<8x8xf32>
    %114 = math.exp %113 : vector<8x8xf32>
    %cst_30 = arith.constant dense<0.000000e+00> : vector<8xf32>
    %115 = vector.multi_reduction <add>, %114, %cst_30 [1] : vector<8x8xf32> to vector<8xf32>
    %116 = vector.shape_cast %115 : vector<8xf32> to vector<8x1xf32>
    %117 = arith.truncf %114 : vector<8x8xf32> to vector<8x8xbf16>
    %118 = arith.truncf %90 : vector<8x8xf32> to vector<8x8xbf16>
    %cst_31 = arith.constant dense<0.000000e+00> : vector<8x8xf32>
    %119 = tpu.matmul %117, %118, %cst_31 {dimension_numbers = #tpu.dot_dimension_numbers<[1], [0], [0], [1], [0, 0, 1, 1], [], []>} : vector<8x8xbf16>, vector<8x8xbf16>, vector<8x8xf32> -> vector<8x8xf32>
    %120 = tpu.reciprocal %116 {approx = true} : vector<8x1xf32> -> vector<8x1xf32>
    %121 = vector.broadcast %120 : vector<8x1xf32> to vector<8x8xf32>
    %122 = arith.mulf %119, %121 : vector<8x8xf32>
    %123 = arith.truncf %122 : vector<8x8xf32> to vector<8x8xbf16>
    %c16 = arith.constant 16 : index
    %c0_32 = arith.constant 0 : index
    %124 = vector.load %arg3[%c16, %c0_32] : memref<32x32xbf16, #tpu.memory_space<vmem>>, vector<8x32xbf16>
    %cst_33 = arith.constant dense<0.000000e+00> : vector<8x32xf32>
    %125 = tpu.matmul %123, %124, %cst_33 {dimension_numbers = #tpu.dot_dimension_numbers<[1], [0], [0], [1], [0, 0, 1, 1], [], []>} : vector<8x8xbf16>, vector<8x32xbf16>, vector<8x32xf32> -> vector<8x32xf32>
    %126 = arith.addf %87, %125 : vector<8x32xf32>
    %127 = vector.extract_strided_slice %3 {offsets = [0, 24], sizes = [8, 8], strides = [1, 1]} : vector<8x96xf32> to vector<8x8xf32>
    %128 = vector.extract_strided_slice %3 {offsets = [0, 56], sizes = [8, 8], strides = [1, 1]} : vector<8x96xf32> to vector<8x8xf32>
    %129 = vector.extract_strided_slice %3 {offsets = [0, 88], sizes = [8, 8], strides = [1, 1]} : vector<8x96xf32> to vector<8x8xf32>
    %130 = vector.extract_strided_slice %127 {offsets = [0, 4], sizes = [8, 4], strides = [1, 1]} : vector<8x8xf32> to vector<8x4xf32>
    %131 = vector.extract_strided_slice %127 {offsets = [0, 0], sizes = [8, 4], strides = [1, 1]} : vector<8x8xf32> to vector<8x4xf32>
    %132 = tpu.concatenate %130, %131 in 1 : vector<8x4xf32>, vector<8x4xf32> -> vector<8x8xf32>
    %133 = arith.mulf %127, %4 : vector<8x8xf32>
    %134 = arith.mulf %132, %5 : vector<8x8xf32>
    %135 = arith.addf %133, %134 : vector<8x8xf32>
    %136 = vector.extract_strided_slice %128 {offsets = [0, 4], sizes = [8, 4], strides = [1, 1]} : vector<8x8xf32> to vector<8x4xf32>
    %137 = vector.extract_strided_slice %128 {offsets = [0, 0], sizes = [8, 4], strides = [1, 1]} : vector<8x8xf32> to vector<8x4xf32>
    %138 = tpu.concatenate %136, %137 in 1 : vector<8x4xf32>, vector<8x4xf32> -> vector<8x8xf32>
    %139 = arith.mulf %128, %4 : vector<8x8xf32>
    %140 = arith.mulf %138, %5 : vector<8x8xf32>
    %141 = arith.addf %139, %140 : vector<8x8xf32>
    %142 = arith.truncf %135 : vector<8x8xf32> to vector<8x8xbf16>
    %143 = arith.truncf %141 : vector<8x8xf32> to vector<8x8xbf16>
    %cst_34 = arith.constant dense<0.000000e+00> : vector<8x8xf32>
    %144 = tpu.matmul %142, %143, %cst_34 {dimension_numbers = #tpu.dot_dimension_numbers<[1], [1], [0], [0], [0, 0, 1, 0], [], []>} : vector<8x8xbf16>, vector<8x8xbf16>, vector<8x8xf32> -> vector<8x8xf32>
    %cst_35 = arith.constant 0.353553385 : f32
    %145 = vector.broadcast %cst_35 : f32 to vector<8x8xf32>
    %146 = arith.mulf %144, %145 : vector<8x8xf32>
    %cst_36 = arith.constant -1.000000e+30 : f32
    %147 = vector.broadcast %cst_36 : f32 to vector<8x8xf32>
    %148 = arith.select %8, %146, %147 : vector<8x8xi1>, vector<8x8xf32>
    %cst_37 = arith.constant dense<0xFF800000> : vector<8xf32>
    %149 = vector.multi_reduction <maximumf>, %148, %cst_37 [1] : vector<8x8xf32> to vector<8xf32>
    %150 = vector.shape_cast %149 : vector<8xf32> to vector<8x1xf32>
    %151 = vector.broadcast %150 : vector<8x1xf32> to vector<8x8xf32>
    %152 = arith.subf %148, %151 : vector<8x8xf32>
    %153 = math.exp %152 : vector<8x8xf32>
    %cst_38 = arith.constant dense<0.000000e+00> : vector<8xf32>
    %154 = vector.multi_reduction <add>, %153, %cst_38 [1] : vector<8x8xf32> to vector<8xf32>
    %155 = vector.shape_cast %154 : vector<8xf32> to vector<8x1xf32>
    %156 = arith.truncf %153 : vector<8x8xf32> to vector<8x8xbf16>
    %157 = arith.truncf %129 : vector<8x8xf32> to vector<8x8xbf16>
    %cst_39 = arith.constant dense<0.000000e+00> : vector<8x8xf32>
    %158 = tpu.matmul %156, %157, %cst_39 {dimension_numbers = #tpu.dot_dimension_numbers<[1], [0], [0], [1], [0, 0, 1, 1], [], []>} : vector<8x8xbf16>, vector<8x8xbf16>, vector<8x8xf32> -> vector<8x8xf32>
    %159 = tpu.reciprocal %155 {approx = true} : vector<8x1xf32> -> vector<8x1xf32>
    %160 = vector.broadcast %159 : vector<8x1xf32> to vector<8x8xf32>
    %161 = arith.mulf %158, %160 : vector<8x8xf32>
    %162 = arith.truncf %161 : vector<8x8xf32> to vector<8x8xbf16>
    %c24 = arith.constant 24 : index
    %c0_40 = arith.constant 0 : index
    %163 = vector.load %arg3[%c24, %c0_40] : memref<32x32xbf16, #tpu.memory_space<vmem>>, vector<8x32xbf16>
    %cst_41 = arith.constant dense<0.000000e+00> : vector<8x32xf32>
    %164 = tpu.matmul %162, %163, %cst_41 {dimension_numbers = #tpu.dot_dimension_numbers<[1], [0], [0], [1], [0, 0, 1, 1], [], []>} : vector<8x8xbf16>, vector<8x32xbf16>, vector<8x32xf32> -> vector<8x32xf32>
    %165 = arith.addf %126, %164 : vector<8x32xf32>
    %c0_42 = arith.constant 0 : index
    %c0_43 = arith.constant 0 : index
    %166 = vector.load %arg4[%c0_42, %c0_43] : memref<1x32xf32, #tpu.memory_space<vmem>>, vector<1x32xf32>
    %167 = vector.broadcast %166 : vector<1x32xf32> to vector<8x32xf32>
    %168 = arith.addf %165, %167 : vector<8x32xf32>
    %c0_44 = arith.constant 0 : index
    %c0_45 = arith.constant 0 : index
    %c0_46 = arith.constant 0 : index
    %169 = vector.load %arg7[%c0_44, %c0_45, %c0_46] : memref<1x8x32xf32, #tpu.memory_space<vmem>>, vector<1x8x32xf32>
    %170 = vector.shape_cast %169 : vector<1x8x32xf32> to vector<8x32xf32>
    %171 = vector.shape_cast %168 : vector<8x32xf32> to vector<1x8x32xf32>
    tpu.vector_store %arg7[%c0_44, %c0_45, %c0_46], %171 {strides = array<i32>} : memref<1x8x32xf32, #tpu.memory_space<vmem>>, vector<1x8x32xf32>,
    return
  }
  func.func @transform_0(%arg0: i32) -> (i32, i32, i32) {
    %c0_i32 = arith.constant 0 : i32
    %c0_i32_0 = arith.constant 0 : i32
    %c0_i32_1 = arith.constant 0 : i32
    return %arg0, %c0_i32, %c0_i32_0 : i32, i32, i32
  }
  func.func @transform_1(%arg0: i32) -> (i32, i32) {
    %c0_i32 = arith.constant 0 : i32
    %c0_i32_0 = arith.constant 0 : i32
    %c0_i32_1 = arith.constant 0 : i32
    return %c0_i32, %c0_i32_0 : i32, i32
  }
  func.func @transform_2(%arg0: i32) -> (i32, i32) {
    %c0_i32 = arith.constant 0 : i32
    %c0_i32_0 = arith.constant 0 : i32
    %c0_i32_1 = arith.constant 0 : i32
    return %c0_i32, %c0_i32_0 : i32, i32
  }
  func.func @transform_3(%arg0: i32) -> (i32, i32) {
    %c0_i32 = arith.constant 0 : i32
    %c0_i32_0 = arith.constant 0 : i32
    %c0_i32_1 = arith.constant 0 : i32
    return %c0_i32, %c0_i32_0 : i32, i32
  }
  func.func @transform_4(%arg0: i32) -> (i32, i32) {
    %c0_i32 = arith.constant 0 : i32
    %c0_i32_0 = arith.constant 0 : i32
    %c0_i32_1 = arith.constant 0 : i32
    return %c0_i32, %c0_i32_0 : i32, i32
  }
  func.func @transform_5(%arg0: i32) -> (i32, i32) {
    %c0_i32 = arith.constant 0 : i32
    %c0_i32_0 = arith.constant 0 : i32
    %c0_i32_1 = arith.constant 0 : i32
    return %c0_i32, %c0_i32_0 : i32, i32
  }
  func.func @transform_6(%arg0: i32) -> (i32, i32, i32) {
    %c0_i32 = arith.constant 0 : i32
    %c0_i32_0 = arith.constant 0 : i32
    %c0_i32_1 = arith.constant 0 : i32
    return %arg0, %c0_i32, %c0_i32_0 : i32, i32, i32
  }
}

</mosaic_0001>

<llo_original>
// kernel: tpu_custom_call.1
$region0: #{tpu_custom_call.1}
  #allocation0 [shape = 'u32[]', space=smem, size = 0x4, offset = 0x4, fixed_abs, tag = 'smem constant byte address 0x4 - core index']
  #allocation1 [shape = 'u32[144,128]{1,0:T(1,128)}', space=vmem, size = 0x12000, scoped, tag = 'internal scratch']
  %s0 = inlined_call_operand.hbm [shape: bf16[2,8,32], index: 0, kind: input, shape index: {}]
  %s1 = inlined_call_operand.hbm [shape: bf16[32,96], index: 1, kind: input, shape index: {}]
  %s2 = inlined_call_operand.hbm [shape: bf16[32,32], index: 2, kind: input, shape index: {}]
  %s3 = inlined_call_operand.vmem [shape: f32[1,32], index: 3, kind: input, shape index: {}]
  %s4 = inlined_call_operand.vmem [shape: f32[8,8], index: 4, kind: input, shape index: {}]
  %s5 = inlined_call_operand.vmem [shape: f32[8,8], index: 5, kind: input, shape index: {}]
  %s6 = inlined_call_operand.hbm [shape: f32[2,8,32], index: 6, kind: output, shape index: {}]
  %s7 = sld [smem:[#allocation0]]
  $region69: #{tpu_custom_call.1} parent=0
    _
  %s9 = ssub.s32 1, %s7
  %s10 = scalar_select 0, %s9, %s7
  $region1: #{tpu_custom_call.1} parent=0
    #allocation2 [shape = 'u8[4096]{0}', space=vmem, size = 0x1000, scoped, tag = 'input window, operand 0']
    #allocation3 [shape = 's32[2]{0}', space=sflag, size = 0x8, scoped, tag = 'scoped memory for tpu_custom_call.1']
    #allocation4 [shape = 's32[2]{0}', space=sflag, size = 0x8, scoped, tag = 'scoped memory for tpu_custom_call.1']
    #allocation5 [shape = 'u8[8192]{0}', space=vmem, size = 0x2000, scoped, tag = 'input window, operand 1, single buffered']
    #allocation6 [shape = 's32[1]{0}', space=sflag, size = 0x4, scoped, tag = 'scoped memory for tpu_custom_call.1']
    #allocation7 [shape = 'u8[8192]{0}', space=vmem, size = 0x2000, scoped, tag = 'input window, operand 2, single buffered']
    #allocation8 [shape = 'u8[8192]{0}', space=vmem, size = 0x2000, scoped, tag = 'output window, operand 0']
    %11 = vsyncpa [#allocation3], 0
    %s12 = scalar_lea.sflag [#allocation3], 1
    %13 = vsyncpa %s12, 0
    %14 = vsyncpa [#allocation6], 0
    %15 = vsyncpa [#allocation4], 0
    %s16 = scalar_lea.sflag [#allocation4], 1
    %17 = vsyncpa %s16, 0
    loop: start=0, step=1, limit=4
    $region2: #{tpu_custom_call.1} parent=1 // loop_pre_header
      _
    $region3: #{tpu_custom_call.1} parent=1 // loop_header
      %s19 = sphi 0, %s23
      %p20 = scmp.ge.s32.totalorder %s19, 4
      %s29 = sphi 0, %s31
      %s32 = sphi 0, %s29
      %s33 = sphi 0, %s32
      %s49 = sphi 0, %s33
      %s53 = sphi 0, %s53
      %s55 = sphi 0, %s53
      %s56 = sphi 0, %s55
      %s70 = sphi 0, %s56
      %s74 = sphi 0, %s74
      %s76 = sphi 0, %s74
      %s77 = sphi 0, %s76
      %s91 = sphi 0, %s77
      %s95 = sphi 0, %s95
      %s97 = sphi 0, %s95
      %s98 = sphi 0, %s97
      %s112 = sphi 0, %s98
      %s116 = sphi 0, %s116
      %s118 = sphi 0, %s116
      %s119 = sphi 0, %s118
      %s133 = sphi 0, %s119
      %s137 = sphi 0, %s137
      %s139 = sphi 0, %s137
      %s140 = sphi 0, %s139
      %s154 = sphi 0, %s140
      %s160 = sphi 0, %s162
      %s163 = sphi 0, %s160
      %s164 = sphi 0, %s163
      %s180 = sphi 0, %s164
    $region4: #{tpu_custom_call.1} parent=1 // loop_header_branch
      %22 = sbr.rel (%p20) target = $region8
    $region5: #{tpu_custom_call.1} parent=1 // loop_body
      %s24 = ssub.s32 %s19, 1
      %s25 = ssub.s32 %s19, 2
      %s26 = sadd.s32 %s19, 1
      %s27 = ssub.s32 %s19, %s26
      %p28 = scmp.eq.s32.totalorder %s27, 0
      %s30 = sadd.s32 %s29, 1
      %s31 = scalar_select %p28, %s29, %s30
      %p34 = pneg %p28
      %p35 = scmp.eq.s32.totalorder %s19, 1
      %p36 = por %p34, %p35
      %p37 = scmp.ne.s32.totalorder %s29, %s32
      %p38 = scmp.eq.s32.totalorder %s19, 0
      %p39 = por %p37, %p38
      %p40 = scmp.ne.s32.totalorder %s29, %s32
      %p41 = scmp.eq.s32.totalorder %s24, 1
      %p42 = por %p40, %p41
      %p43 = scmp.ne.s32.totalorder %s32, %s33
      %p44 = scmp.eq.s32.totalorder %s24, 0
      %p45 = por %p43, %p44
      %p46 = scmp.ne.s32.totalorder %s32, %s33
      %p47 = scmp.eq.s32.totalorder %s25, 1
      %p48 = por %p46, %p47
      %p50 = scmp.ne.s32.totalorder %s33, %s49
      %p51 = scmp.eq.s32.totalorder %s25, 0
      %p52 = por %p50, %p51
      %s54 = sadd.s32 %s53, 1
      %p57 = scmp.eq.s32.totalorder %s19, 1
      %p58 = scmp.ne.s32.totalorder %s53, %s55
      %p59 = scmp.eq.s32.totalorder %s19, 0
      %p60 = por %p58, %p59
      %p61 = scmp.ne.s32.totalorder %s53, %s55
      %p62 = scmp.eq.s32.totalorder %s24, 1
      %p63 = por %p61, %p62
      %p64 = scmp.ne.s32.totalorder %s55, %s56
      %p65 = scmp.eq.s32.totalorder %s24, 0
      %p66 = por %p64, %p65
      %p67 = scmp.ne.s32.totalorder %s55, %s56
      %p68 = scmp.eq.s32.totalorder %s25, 1
      %p69 = por %p67, %p68
      %p71 = scmp.ne.s32.totalorder %s56, %s70
      %p72 = scmp.eq.s32.totalorder %s25, 0
      %p73 = por %p71, %p72
      %s75 = sadd.s32 %s74, 1
      %p78 = scmp.eq.s32.totalorder %s19, 1
      %p79 = scmp.ne.s32.totalorder %s74, %s76
      %p80 = scmp.eq.s32.totalorder %s19, 0
      %p81 = por %p79, %p80
      %p82 = scmp.ne.s32.totalorder %s74, %s76
      %p83 = scmp.eq.s32.totalorder %s24, 1
      %p84 = por %p82, %p83
      %p85 = scmp.ne.s32.totalorder %s76, %s77
      %p86 = scmp.eq.s32.totalorder %s24, 0
      %p87 = por %p85, %p86
      %p88 = scmp.ne.s32.totalorder %s76, %s77
      %p89 = scmp.eq.s32.totalorder %s25, 1
      %p90 = por %p88, %p89
      %p92 = scmp.ne.s32.totalorder %s77, %s91
      %p93 = scmp.eq.s32.totalorder %s25, 0
      %p94 = por %p92, %p93
      %s96 = sadd.s32 %s95, 1
      %p99 = scmp.eq.s32.totalorder %s19, 1
      %p100 = scmp.ne.s32.totalorder %s95, %s97
      %p101 = scmp.eq.s32.totalorder %s19, 0
      %p102 = por %p100, %p101
      %p103 = scmp.ne.s32.totalorder %s95, %s97
      %p104 = scmp.eq.s32.totalorder %s24, 1
      %p105 = por %p103, %p104
      %p106 = scmp.ne.s32.totalorder %s97, %s98
      %p107 = scmp.eq.s32.totalorder %s24, 0
      %p108 = por %p106, %p107
      %p109 = scmp.ne.s32.totalorder %s97, %s98
      %p110 = scmp.eq.s32.totalorder %s25, 1
      %p111 = por %p109, %p110
      %p113 = scmp.ne.s32.totalorder %s98, %s112
      %p114 = scmp.eq.s32.totalorder %s25, 0
      %p115 = por %p113, %p114
      %s117 = sadd.s32 %s116, 1
      %p120 = scmp.eq.s32.totalorder %s19, 1
      %p121 = scmp.ne.s32.totalorder %s116, %s118
      %p122 = scmp.eq.s32.totalorder %s19, 0
      %p123 = por %p121, %p122
      %p124 = scmp.ne.s32.totalorder %s116, %s118
      %p125 = scmp.eq.s32.totalorder %s24, 1
      %p126 = por %p124, %p125
      %p127 = scmp.ne.s32.totalorder %s118, %s119
      %p128 = scmp.eq.s32.totalorder %s24, 0
      %p129 = por %p127, %p128
      %p130 = scmp.ne.s32.totalorder %s118, %s119
      %p131 = scmp.eq.s32.totalorder %s25, 1
      %p132 = por %p130, %p131
      %p134 = scmp.ne.s32.totalorder %s119, %s133
      %p135 = scmp.eq.s32.totalorder %s25, 0
      %p136 = por %p134, %p135
      %s138 = sadd.s32 %s137, 1
      %p141 = scmp.eq.s32.totalorder %s19, 1
      %p142 = scmp.ne.s32.totalorder %s137, %s139
      %p143 = scmp.eq.s32.totalorder %s19, 0
      %p144 = por %p142, %p143
      %p145 = scmp.ne.s32.totalorder %s137, %s139
      %p146 = scmp.eq.s32.totalorder %s24, 1
      %p147 = por %p145, %p146
      %p148 = scmp.ne.s32.totalorder %s139, %s140
      %p149 = scmp.eq.s32.totalorder %s24, 0
      %p150 = por %p148, %p149
      %p151 = scmp.ne.s32.totalorder %s139, %s140
      %p152 = scmp.eq.s32.totalorder %s25, 1
      %p153 = por %p151, %p152
      %p155 = scmp.ne.s32.totalorder %s140, %s154
      %p156 = scmp.eq.s32.totalorder %s25, 0
      %p157 = por %p155, %p156
      %s158 = ssub.s32 %s19, %s26
      %p159 = scmp.eq.s32.totalorder %s158, 0
      %s161 = sadd.s32 %s160, 1
      %s162 = scalar_select %p159, %s160, %s161
      %p165 = pneg %p159
      %p166 = scmp.eq.s32.totalorder %s19, 1
      %p167 = por %p165, %p166
      %p168 = scmp.ne.s32.totalorder %s160, %s163
      %p169 = scmp.eq.s32.totalorder %s19, 0
      %p170 = por %p168, %p169
      %p171 = scmp.ne.s32.totalorder %s160, %s163
      %p172 = scmp.eq.s32.totalorder %s24, 1
      %p173 = por %p171, %p172
      %p174 = scmp.ne.s32.totalorder %s163, %s164
      %p175 = scmp.eq.s32.totalorder %s24, 0
      %p176 = por %p174, %p175
      %p177 = scmp.ne.s32.totalorder %s163, %s164
      %p178 = scmp.eq.s32.totalorder %s25, 1
      %p179 = por %p177, %p178
      %p181 = scmp.ne.s32.totalorder %s164, %s180
      %p182 = scmp.eq.s32.totalorder %s25, 0
      %p183 = por %p181, %p182
      %p184 = scmp.le.s32.totalorder 1, %s19
      %p185 = scmp.lt.s32.totalorder %s19, 3
      %p186 = pnand %p184, %p185
      %p187 = pneg %p186
      // Predicated region
      $region9: #{tpu_custom_call.1} parent=5 // pred_check
        _
      $region10: #{tpu_custom_call.1} parent=5 // pred_check_branch
        %189 = sbr.rel (%p186) target = $region12
      $region11: #{tpu_custom_call.1} parent=5 // pred_region
        %s190 = ssub.s32 %s19, 1
        // Predicated region
        $region13: #{tpu_custom_call.1} parent=11 // pred_check
          %p191 = pneg %p66
        $region14: #{tpu_custom_call.1} parent=11 // pred_check_branch
          %193 = sbr.rel (%p191) target = $region16
        $region15: #{tpu_custom_call.1} parent=11 // pred_region
          %s195 = ssub.s32 256, 256
          %196 = vsyncadd [#allocation6], %s195
          %s197 = sshll.u32 [#allocation5], 4
          %s198 = int_to_ptr.vmem [resolvable:$true] %s197
          %203 = dma.hbm_to_vmem [thread:$0]  %s1, 256, %s198, [#allocation6], 64, 64, 4
        $region16: #{tpu_custom_call.1} parent=11 // pred_fallthru
          _
        // Predicated region
        $region17: #{tpu_custom_call.1} parent=11 // pred_check
          %p204 = pneg %p87
        $region18: #{tpu_custom_call.1} parent=11 // pred_check_branch
          %206 = sbr.rel (%p204) target = $region20
        $region19: #{tpu_custom_call.1} parent=11 // pred_region
          %s208 = ssub.s32 256, 256
          %209 = vsyncadd [#allocation6], %s208
          %s210 = sshll.u32 [#allocation7], 4
          %s211 = int_to_ptr.vmem [resolvable:$true] %s210
          %216 = dma.hbm_to_vmem [thread:$0]  %s2, 256, %s211, [#allocation6], 64, 64, 4
        $region20: #{tpu_custom_call.1} parent=11 // pred_fallthru
          _
        // Predicated region
        $region21: #{tpu_custom_call.1} parent=11 // pred_check
          %p217 = pneg %p108
        $region22: #{tpu_custom_call.1} parent=11 // pred_check_branch
          %219 = sbr.rel (%p217) target = $region24
        $region23: #{tpu_custom_call.1} parent=11 // pred_region
          _
        $region24: #{tpu_custom_call.1} parent=11 // pred_fallthru
          _
        // Predicated region
        $region25: #{tpu_custom_call.1} parent=11 // pred_check
          %p220 = pneg %p129
        $region26: #{tpu_custom_call.1} parent=11 // pred_check_branch
          %222 = sbr.rel (%p220) target = $region28
        $region27: #{tpu_custom_call.1} parent=11 // pred_region
          _
        $region28: #{tpu_custom_call.1} parent=11 // pred_fallthru
          _
        // Predicated region
        $region29: #{tpu_custom_call.1} parent=11 // pred_check
          %p223 = pneg %p150
        $region30: #{tpu_custom_call.1} parent=11 // pred_check_branch
          %225 = sbr.rel (%p223) target = $region32
        $region31: #{tpu_custom_call.1} parent=11 // pred_region
          _
        $region32: #{tpu_custom_call.1} parent=11 // pred_fallthru
          _
      $region12: #{tpu_custom_call.1} parent=5 // pred_fallthru
        _
      %p226 = scmp.lt.s32.totalorder %s19, 2
      // Predicated region
      $region33: #{tpu_custom_call.1} parent=5 // pred_check
        %p227 = pneg %p226
      $region34: #{tpu_custom_call.1} parent=5 // pred_check_branch
        %229 = sbr.rel (%p227) target = $region36
      $region35: #{tpu_custom_call.1} parent=5 // pred_region
        // Predicated region
        $region37: #{tpu_custom_call.1} parent=35 // pred_check
          %p230 = pneg %p39
        $region38: #{tpu_custom_call.1} parent=35 // pred_check_branch
          %232 = sbr.rel (%p230) target = $region40
        $region39: #{tpu_custom_call.1} parent=35 // pred_region
          %s233 = sand.u32 %s29, 1
          %s234 = scalar_lea.sflag [#allocation3], %s233
          %s235 = sand.u32 %s29, 1
          %s236 = smul.addr %s235, 4
          %s237 = scalar_lea.vmem [#allocation2], %s236
          %s239 = ssub.s32 64, 64
          %240 = vsyncadd %s234, %s239
          %s241 = smul.addr %s19, 64
          %s242 = scalar_lea.hbm %s0, %s241
          %s244 = sshll.u32 %s237, 4
          %s245 = int_to_ptr.vmem [resolvable:$true] %s244
          %247 = dma.hbm_to_vmem [thread:$0]  %s242, 64, %s245, %s234
        $region40: #{tpu_custom_call.1} parent=35 // pred_fallthru
          _
      $region36: #{tpu_custom_call.1} parent=5 // pred_fallthru
        _
      %p248 = scmp.le.s32.totalorder 1, %s19
      %p249 = scmp.lt.s32.totalorder %s19, 3
      %p250 = pnand %p248, %p249
      %p251 = pneg %p250
      // Predicated region
      $region41: #{tpu_custom_call.1} parent=5 // pred_check
        _
      $region42: #{tpu_custom_call.1} parent=5 // pred_check_branch
        %253 = sbr.rel (%p250) target = $region44
      $region43: #{tpu_custom_call.1} parent=5 // pred_region
        %s254 = ssub.s32 %s19, 1
        %s255 = sand.u32 %s32, 1
        %s256 = scalar_lea.sflag [#allocation3], %s255
        %s257 = sand.u32 %s32, 1
        %s258 = smul.addr %s257, 4
        %s259 = scalar_lea.vmem [#allocation2], %s258
        // Predicated region
        $region45: #{tpu_custom_call.1} parent=43 // pred_check
          %p260 = pneg %p45
        $region46: #{tpu_custom_call.1} parent=43 // pred_check_branch
          %262 = sbr.rel (%p260) target = $region48
        $region47: #{tpu_custom_call.1} parent=43 // pred_region
          %263 = dma.done %s256, 64
        $region48: #{tpu_custom_call.1} parent=43 // pred_fallthru
          _
        // Predicated region
        $region49: #{tpu_custom_call.1} parent=43 // pred_check
          %p264 = pneg %p66
        $region50: #{tpu_custom_call.1} parent=43 // pred_check_branch
          %266 = sbr.rel (%p264) target = $region52
        $region51: #{tpu_custom_call.1} parent=43 // pred_region
          %267 = dma.done [#allocation6], 256
        $region52: #{tpu_custom_call.1} parent=43 // pred_fallthru
          _
        // Predicated region
        $region53: #{tpu_custom_call.1} parent=43 // pred_check
          %p268 = pneg %p87
        $region54: #{tpu_custom_call.1} parent=43 // pred_check_branch
          %270 = sbr.rel (%p268) target = $region56
        $region55: #{tpu_custom_call.1} parent=43 // pred_region
          %271 = dma.done [#allocation6], 256
        $region56: #{tpu_custom_call.1} parent=43 // pred_fallthru
          _
        %s272 = sand.u32 %s32, 1
        %s273 = scalar_lea.sflag [#allocation3], %s272
        %s274 = sand.u32 %s32, 1
        %s275 = smul.addr %s274, 4
        %s276 = scalar_lea.vmem [#allocation2], %s275
        %p277 = pneg %p45
        %p278 = pneg %p42
        %p279 = pneg %p66
        %p280 = pneg %p63
        %p281 = pneg %p87
        %p282 = pneg %p84
        %p283 = pneg %p108
        %p284 = pneg %p105
        %p285 = pneg %p129
        %p286 = pneg %p126
        %p287 = pneg %p150
        %p288 = pneg %p147
        %p289 = pneg %p176
        %p290 = pneg %p173
        %s291 = sand.u32 %s163, 1
        %s292 = scalar_lea.sflag [#allocation4], %s291
        %s293 = sand.u32 %s163, 1
        %s294 = smul.addr %s293, 8
        %s295 = scalar_lea.vmem [#allocation8], %s294
        %v297 = vld [vmem:[%s259] sm:$0xf]
        %v298 = vld [vmem:[#allocation5] sm:$0xf]
        %v299 = vld [vmem:[#allocation5 + $0x4] sm:$0xf]
        %v300 = vld [vmem:[#allocation5 + $0x8] sm:$0xf]
        %v301 = vld [vmem:[#allocation5 + $0xc] sm:$0xf]
        %v306 = vunpack.c.l.b16 %v298
        %v307 = vunpack.c.l.b16 %v299
        %v308 = vunpack.c.l.b16 %v300
        %v309 = vunpack.c.l.b16 %v301
        %v310 = vpack.c.b16 %v307, %v306
        %v311 = vpack.c.b16 %v309, %v308
        %vm314 = vcmask 261120
        %v316 = vsel %vm314, %v297, 0
        %318 = vmatprep.subr.bf16.mxu0 0
        %319 = vmatpush1.bf16.msra.mxu0 %v310
        %320 = vmatprep.subr.bf16.mxu0 0
        %321 = vmatpush1.bf16.msra.mxu0 %v311
        %322 = vmatprep.subr.bf16.mxu0 0
        %323 = vmatpush1.bf16.msra.mxu0 0
        %324 = vmatprep.subr.bf16.mxu0 0
        %325 = vmatpush1.bf16.msra.mxu0 0
        %326 = vmatprep.subr.bf16.mxu0 0
        %327 = vmatpush1.bf16.msra.mxu0 0
        %328 = vmatprep.subr.bf16.mxu0 0
        %329 = vmatpush1.bf16.msra.mxu0 0
        %330 = vmatprep.subr.bf16.mxu0 0
        %331 = vmatpush1.bf16.msra.mxu0 0
        %332 = vmatprep.subr.bf16.mxu0 0
        %333 = vmatpush1.bf16.msra.mxu0 0
        %334 = vmatprep.subr.bf16.mxu0 0
        %335 = vmatpush1.bf16.msra.mxu0 0
        %336 = vmatprep.subr.bf16.mxu0 0
        %337 = vmatpush1.bf16.msra.mxu0 0
        %338 = vmatprep.subr.bf16.mxu0 0
        %339 = vmatpush1.bf16.msra.mxu0 0
        %340 = vmatprep.subr.bf16.mxu0 0
        %341 = vmatpush1.bf16.msra.mxu0 0
        %342 = vmatprep.subr.bf16.mxu0 0
        %343 = vmatpush1.bf16.msra.mxu0 0
        %344 = vmatprep.subr.bf16.mxu0 0
        %345 = vmatpush1.bf16.msra.mxu0 0
        %346 = vmatprep.subr.bf16.mxu0 0
        %347 = vmatpush1.bf16.msra.mxu0 0
        %348 = vmatprep.subr.bf16.mxu0 0
        %349 = vmatpush1.bf16.msra.mxu0 0
        %350 = vmatprep.mubr.bf16.mxu0 0
        %351 = vmatmul.mubr.bf16.gmra.mrb[0].mxu0 %v316
        %v352 = vpop.f32.mrb[0].mxu0
        %v353 = vadd.f32 0.0, %v352
        %v354 = vpop.f32.mrb[0].mxu0
        %v355 = vpop.f32.mrb[0].mxu0
        %v356 = vpop.f32.mrb[0].mxu0
        %357 = vdwg.mxu0
        %v358 = vld [vmem:[%s4] sm:$0xff]
        %v359 = vld [vmem:[%s5] sm:$0xff]
        %v360 = vlaneseq
        %v361 = vshrl.u32 %v360, 7
        %v362 = vlaneseq
        %v363 = vand.u32 %v362, 127
        %vm364 = vcmp.le.s32.totalorder %v363, %v361
        %366 = vrot.lane.b32.xlu0 %v353, 124
        %v367 = vpop.permute.xlu0 %366
        %369 = vrot.lane.b32.xlu0 %v353, 4
        %v370 = vpop.permute.xlu0 %369
        %vm372 = vcmask 31744
        %v373 = vsel %vm372, %v367, %v370
        %v374 = vmul.f32 %v353, %v358
        %v375 = vmul.f32 %v373, %v359
        %v376 = vadd.f32 %v374, %v375
        %377 = vrot.lane.b32.xlu0 %v353, 92
        %v378 = vpop.permute.xlu0 %377
        %380 = vrot.lane.b32.xlu0 %v353, 100
        %v381 = vpop.permute.xlu0 %380
        %v383 = vsel %vm372, %v378, %v381
        %385 = vrot.lane.b32.xlu0 %v358, 32
        %v386 = vpop.permute.xlu0 %385
        %v388 = vmul.f32 %v353, %v386
        %v389 = vmul.f32 %v383, %v359
        %391 = vrot.lane.b32.xlu0 %v389, 32
        %v392 = vpop.permute.xlu0 %391
        %v394 = vadd.f32 %v388, %v392
        %v395 = vpack.c.bf16 %v376, %v376
        %v396 = vpack.c.bf16 %v394, %v394
        %398 = vrot.lane.b32.xlu0 %v396, 96
        %v399 = vpop.permute.xlu0 %398
        %vm400 = vcmask 64512
        %v402 = vsel %vm400, %v395, 0
        %v405 = vsel %vm400, %v399, 0
        %407 = vmatprep.subr.bf16.mxu0 0
        %408 = vmatpush1.bf16.xpose.msra.mxu0 %v405
        %409 = vmatprep.subr.bf16.mxu0 0
        %410 = vmatpush1.bf16.xpose.msra.mxu0 0
        %411 = vmatprep.subr.bf16.mxu0 0
        %412 = vmatpush1.bf16.xpose.msra.mxu0 0
        %413 = vmatprep.subr.bf16.mxu0 0
        %414 = vmatpush1.bf16.xpose.msra.mxu0 0
        %415 = vmatprep.subr.bf16.mxu0 0
        %416 = vmatpush1.bf16.xpose.msra.mxu0 0
        %417 = vmatprep.subr.bf16.mxu0 0
        %418 = vmatpush1.bf16.xpose.msra.mxu0 0
        %419 = vmatprep.subr.bf16.mxu0 0
        %420 = vmatpush1.bf16.xpose.msra.mxu0 0
        %421 = vmatprep.subr.bf16.mxu0 0
        %422 = vmatpush1.bf16.xpose.msra.mxu0 0
        %423 = vmatprep.subr.bf16.mxu0 0
        %424 = vmatpush1.bf16.xpose.msra.mxu0 0
        %425 = vmatprep.subr.bf16.mxu0 0
        %426 = vmatpush1.bf16.xpose.msra.mxu0 0
        %427 = vmatprep.subr.bf16.mxu0 0
        %428 = vmatpush1.bf16.xpose.msra.mxu0 0
        %429 = vmatprep.subr.bf16.mxu0 0
        %430 = vmatpush1.bf16.xpose.msra.mxu0 0
        %431 = vmatprep.subr.bf16.mxu0 0
        %432 = vmatpush1.bf16.xpose.msra.mxu0 0
        %433 = vmatprep.subr.bf16.mxu0 0
        %434 = vmatpush1.bf16.xpose.msra.mxu0 0
        %435 = vmatprep.subr.bf16.mxu0 0
        %436 = vmatpush1.bf16.xpose.msra.mxu0 0
        %437 = vmatprep.subr.bf16.mxu0 0
        %438 = vmatpush1.bf16.xpose.msra.mxu0 0
        %439 = vmatprep.mubr.bf16.mxu0 0
        %440 = vmatmul.mubr.bf16.gmra.mrb[0].mxu0 %v402
        %v441 = vpop.f32.mrb[0].mxu0
        %v442 = vadd.f32 0.0, %v441
        %v443 = vpop.f32.mrb[0].mxu0
        %v444 = vpop.f32.mrb[0].mxu0
        %v445 = vpop.f32.mrb[0].mxu0
        %446 = vdwg.mxu0
        %v447 = vmul.f32 %v442, 0.35355338
        %v448 = vsel %vm364, %v447, -1e+30
        %v449 = vsel %vm400, %v448, -inf
        %450 = vmax.xlane.f32.xlu0 %v449
        %v451 = vpop.xlane.xlu0 %450
        %v452 = vsub.f32 %v448, %v451
        %v453 = vmul.f32 %v452, 1.442695
        %v454 = vpow.pop %v453
        %v455 = vsel %vm400, %v454, 0.0
        %456 = vadd.xlane.f32.xlu0 %v455
        %v457 = vpop.xlane.xlu0 %456
        %v458 = vpack.c.bf16 %v454, %v454
        %v459 = vpack.c.bf16 %v353, %v353
        %461 = vrot.lane.b32.xlu0 %v459, 64
        %v462 = vpop.permute.xlu0 %461
        %v464 = vsel %vm400, %v458, 0
        %vm466 = vcmask 1043456
        %v468 = vsel %vm466, %v462, 0
        %470 = vmatprep.subr.bf16.mxu0 0
        %471 = vmatpush1.bf16.msra.mxu0 %v468
        %472 = vmatprep.subr.bf16.mxu0 0
        %473 = vmatpush1.bf16.msra.mxu0 0
        %474 = vmatprep.subr.bf16.mxu0 0
        %475 = vmatpush1.bf16.msra.mxu0 0
        %476 = vmatprep.subr.bf16.mxu0 0
        %477 = vmatpush1.bf16.msra.mxu0 0
        %478 = vmatprep.subr.bf16.mxu0 0
        %479 = vmatpush1.bf16.msra.mxu0 0
        %480 = vmatprep.subr.bf16.mxu0 0
        %481 = vmatpush1.bf16.msra.mxu0 0
        %482 = vmatprep.subr.bf16.mxu0 0
        %483 = vmatpush1.bf16.msra.mxu0 0
        %484 = vmatprep.subr.bf16.mxu0 0
        %485 = vmatpush1.bf16.msra.mxu0 0
        %486 = vmatprep.subr.bf16.mxu0 0
        %487 = vmatpush1.bf16.msra.mxu0 0
        %488 = vmatprep.subr.bf16.mxu0 0
        %489 = vmatpush1.bf16.msra.mxu0 0
        %490 = vmatprep.subr.bf16.mxu0 0
        %491 = vmatpush1.bf16.msra.mxu0 0
        %492 = vmatprep.subr.bf16.mxu0 0
        %493 = vmatpush1.bf16.msra.mxu0 0
        %494 = vmatprep.subr.bf16.mxu0 0
        %495 = vmatpush1.bf16.msra.mxu0 0
        %496 = vmatprep.subr.bf16.mxu0 0
        %497 = vmatpush1.bf16.msra.mxu0 0
        %498 = vmatprep.subr.bf16.mxu0 0
        %499 = vmatpush1.bf16.msra.mxu0 0
        %500 = vmatprep.subr.bf16.mxu0 0
        %501 = vmatpush1.bf16.msra.mxu0 0
        %502 = vmatprep.mubr.bf16.mxu0 0
        %503 = vmatmul.mubr.bf16.gmra.mrb[0].mxu0 %v464
        %v504 = vpop.f32.mrb[0].mxu0
        %v505 = vadd.f32 0.0, %v504
        %v506 = vpop.f32.mrb[0].mxu0
        %v507 = vpop.f32.mrb[0].mxu0
        %v508 = vpop.f32.mrb[0].mxu0
        %509 = vdwg.mxu0
        %v510 = vrcp.pop %v457
        %v511 = vmul.f32 %v505, %v510
        %v512 = vpack.c.bf16 %v511, %v511
        %v513 = vld [vmem:[#allocation7] sm:$0xf]
        %514 = vrot.lane.b32.xlu0 %v353, 116
        %v515 = vpop.permute.xlu0 %514
        %v517 = vsel %vm372, %v515, %v367
        %518 = vrot.lane.b32.xlu0 %v358, 8
        %v519 = vpop.permute.xlu0 %518
        %v521 = vmul.f32 %v353, %v519
        %v522 = vmul.f32 %v517, %v359
        %524 = vrot.lane.b32.xlu0 %v522, 8
        %v525 = vpop.permute.xlu0 %524
        %v527 = vadd.f32 %v521, %v525
        %528 = vrot.lane.b32.xlu0 %v353, 84
        %v529 = vpop.permute.xlu0 %528
        %v531 = vsel %vm372, %v529, %v378
        %532 = vrot.lane.b32.xlu0 %v358, 40
        %v533 = vpop.permute.xlu0 %532
        %v535 = vmul.f32 %v353, %v533
        %v536 = vmul.f32 %v531, %v359
        %538 = vrot.lane.b32.xlu0 %v536, 40
        %v539 = vpop.permute.xlu0 %538
        %v541 = vadd.f32 %v535, %v539
        %v542 = vpack.c.bf16 %v527, %v527
        %v543 = vpack.c.bf16 %v541, %v541
        %545 = vrot.lane.b32.xlu0 %v542, 120
        %v546 = vpop.permute.xlu0 %545
        %548 = vrot.lane.b32.xlu0 %v543, 88
        %v549 = vpop.permute.xlu0 %548
        %v551 = vsel %vm400, %v546, 0
        %v554 = vsel %vm400, %v549, 0
        %556 = vmatprep.subr.bf16.mxu0 0
        %557 = vmatpush1.bf16.xpose.msra.mxu0 %v554
        %558 = vmatprep.subr.bf16.mxu0 0
        %559 = vmatpush1.bf16.xpose.msra.mxu0 0
        %560 = vmatprep.subr.bf16.mxu0 0
        %561 = vmatpush1.bf16.xpose.msra.mxu0 0
        %562 = vmatprep.subr.bf16.mxu0 0
        %563 = vmatpush1.bf16.xpose.msra.mxu0 0
        %564 = vmatprep.subr.bf16.mxu0 0
        %565 = vmatpush1.bf16.xpose.msra.mxu0 0
        %566 = vmatprep.subr.bf16.mxu0 0
        %567 = vmatpush1.bf16.xpose.msra.mxu0 0
        %568 = vmatprep.subr.bf16.mxu0 0
        %569 = vmatpush1.bf16.xpose.msra.mxu0 0
        %570 = vmatprep.subr.bf16.mxu0 0
        %571 = vmatpush1.bf16.xpose.msra.mxu0 0
        %572 = vmatprep.subr.bf16.mxu0 0
        %573 = vmatpush1.bf16.xpose.msra.mxu0 0
        %574 = vmatprep.subr.bf16.mxu0 0
        %575 = vmatpush1.bf16.xpose.msra.mxu0 0
        %576 = vmatprep.subr.bf16.mxu0 0
        %577 = vmatpush1.bf16.xpose.msra.mxu0 0
        %578 = vmatprep.subr.bf16.mxu0 0
        %579 = vmatpush1.bf16.xpose.msra.mxu0 0
        %580 = vmatprep.subr.bf16.mxu0 0
        %581 = vmatpush1.bf16.xpose.msra.mxu0 0
        %582 = vmatprep.subr.bf16.mxu0 0
        %583 = vmatpush1.bf16.xpose.msra.mxu0 0
        %584 = vmatprep.subr.bf16.mxu0 0
        %585 = vmatpush1.bf16.xpose.msra.mxu0 0
        %586 = vmatprep.subr.bf16.mxu0 0
        %587 = vmatpush1.bf16.xpose.msra.mxu0 0
        %588 = vmatprep.mubr.bf16.mxu0 0
        %589 = vmatmul.mubr.bf16.gmra.mrb[0].mxu0 %v551
        %v590 = vpop.f32.mrb[0].mxu0
        %v591 = vadd.f32 0.0, %v590
        %v592 = vpop.f32.mrb[0].mxu0
        %v593 = vpop.f32.mrb[0].mxu0
        %v594 = vpop.f32.mrb[0].mxu0
        %595 = vdwg.mxu0
        %v596 = vmul.f32 %v591, 0.35355338
        %v597 = vsel %vm364, %v596, -1e+30
        %v598 = vsel %vm400, %v597, -inf
        %599 = vmax.xlane.f32.xlu0 %v598
        %v600 = vpop.xlane.xlu0 %599
        %v601 = vsub.f32 %v597, %v600
        %v602 = vmul.f32 %v601, 1.442695
        %v603 = vpow.pop %v602
        %v604 = vsel %vm400, %v603, 0.0
        %605 = vadd.xlane.f32.xlu0 %v604
        %v606 = vpop.xlane.xlu0 %605
        %v607 = vpack.c.bf16 %v603, %v603
        %608 = vrot.lane.b32.xlu0 %v459, 56
        %v609 = vpop.permute.xlu0 %608
        %v611 = vsel %vm400, %v607, 0
        %v614 = vsel %vm466, %v609, 0
        %616 = vmatprep.subr.bf16.mxu0 0
        %617 = vmatpush1.bf16.msra.mxu0 %v614
        %618 = vmatprep.subr.bf16.mxu0 0
        %619 = vmatpush1.bf16.msra.mxu0 0
        %620 = vmatprep.subr.bf16.mxu0 0
        %621 = vmatpush1.bf16.msra.mxu0 0
        %622 = vmatprep.subr.bf16.mxu0 0
        %623 = vmatpush1.bf16.msra.mxu0 0
        %624 = vmatprep.subr.bf16.mxu0 0
        %625 = vmatpush1.bf16.msra.mxu0 0
        %626 = vmatprep.subr.bf16.mxu0 0
        %627 = vmatpush1.bf16.msra.mxu0 0
        %628 = vmatprep.subr.bf16.mxu0 0
        %629 = vmatpush1.bf16.msra.mxu0 0
        %630 = vmatprep.subr.bf16.mxu0 0
        %631 = vmatpush1.bf16.msra.mxu0 0
        %632 = vmatprep.subr.bf16.mxu0 0
        %633 = vmatpush1.bf16.msra.mxu0 0
        %634 = vmatprep.subr.bf16.mxu0 0
        %635 = vmatpush1.bf16.msra.mxu0 0
        %636 = vmatprep.subr.bf16.mxu0 0
        %637 = vmatpush1.bf16.msra.mxu0 0
        %638 = vmatprep.subr.bf16.mxu0 0
        %639 = vmatpush1.bf16.msra.mxu0 0
        %640 = vmatprep.subr.bf16.mxu0 0
        %641 = vmatpush1.bf16.msra.mxu0 0
        %642 = vmatprep.subr.bf16.mxu0 0
        %643 = vmatpush1.bf16.msra.mxu0 0
        %644 = vmatprep.subr.bf16.mxu0 0
        %645 = vmatpush1.bf16.msra.mxu0 0
        %646 = vmatprep.subr.bf16.mxu0 0
        %647 = vmatpush1.bf16.msra.mxu0 0
        %648 = vmatprep.mubr.bf16.mxu0 0
        %649 = vmatmul.mubr.bf16.gmra.mrb[0].mxu0 %v611
        %v650 = vpop.f32.mrb[0].mxu0
        %v651 = vadd.f32 0.0, %v650
        %v652 = vpop.f32.mrb[0].mxu0
        %v653 = vpop.f32.mrb[0].mxu0
        %v654 = vpop.f32.mrb[0].mxu0
        %655 = vdwg.mxu0
        %v656 = vrcp.pop %v606
        %v657 = vmul.f32 %v651, %v656
        %v658 = vpack.c.bf16 %v657, %v657
        %v659 = vld [vmem:[#allocation7 + $0x4] sm:$0xf]
        %v661 = vsel %vm400, %v658, 0
        %v664 = vsel %vm466, %v659, 0
        %666 = vmatprep.subr.bf16.mxu0 0
        %667 = vmatpush1.bf16.msra.mxu0 %v664
        %668 = vmatprep.subr.bf16.mxu0 0
        %669 = vmatpush1.bf16.msra.mxu0 0
        %670 = vmatprep.subr.bf16.mxu0 0
        %671 = vmatpush1.bf16.msra.mxu0 0
        %672 = vmatprep.subr.bf16.mxu0 0
        %673 = vmatpush1.bf16.msra.mxu0 0
        %674 = vmatprep.subr.bf16.mxu0 0
        %675 = vmatpush1.bf16.msra.mxu0 0
        %676 = vmatprep.subr.bf16.mxu0 0
        %677 = vmatpush1.bf16.msra.mxu0 0
        %678 = vmatprep.subr.bf16.mxu0 0
        %679 = vmatpush1.bf16.msra.mxu0 0
        %680 = vmatprep.subr.bf16.mxu0 0
        %681 = vmatpush1.bf16.msra.mxu0 0
        %682 = vmatprep.subr.bf16.mxu0 0
        %683 = vmatpush1.bf16.msra.mxu0 0
        %684 = vmatprep.subr.bf16.mxu0 0
        %685 = vmatpush1.bf16.msra.mxu0 0
        %686 = vmatprep.subr.bf16.mxu0 0
        %687 = vmatpush1.bf16.msra.mxu0 0
        %688 = vmatprep.subr.bf16.mxu0 0
        %689 = vmatpush1.bf16.msra.mxu0 0
        %690 = vmatprep.subr.bf16.mxu0 0
        %691 = vmatpush1.bf16.msra.mxu0 0
        %692 = vmatprep.subr.bf16.mxu0 0
        %693 = vmatpush1.bf16.msra.mxu0 0
        %694 = vmatprep.subr.bf16.mxu0 0
        %695 = vmatpush1.bf16.msra.mxu0 0
        %696 = vmatprep.subr.bf16.mxu0 0
        %697 = vmatpush1.bf16.msra.mxu0 0
        %698 = vmatprep.mubr.bf16.mxu0 0
        %699 = vmatmul.mubr.bf16.gmra.mrb[0].mxu0 %v661
        %v700 = vpop.f32.mrb[0].mxu0
        %v701 = vadd.f32 0.0, %v700
        %v702 = vpop.f32.mrb[0].mxu0
        %v703 = vpop.f32.mrb[0].mxu0
        %v704 = vpop.f32.mrb[0].mxu0
        %705 = vdwg.mxu0
        %v707 = vsel %vm400, %v512, 0
        %v710 = vsel %vm466, %v513, 0
        %712 = vmatprep.subr.bf16.mxu0 0
        %713 = vmatpush1.bf16.msra.mxu0 %v710
        %714 = vmatprep.subr.bf16.mxu0 0
        %715 = vmatpush1.bf16.msra.mxu0 0
        %716 = vmatprep.subr.bf16.mxu0 0
        %717 = vmatpush1.bf16.msra.mxu0 0
        %718 = vmatprep.subr.bf16.mxu0 0
        %719 = vmatpush1.bf16.msra.mxu0 0
        %720 = vmatprep.subr.bf16.mxu0 0
        %721 = vmatpush1.bf16.msra.mxu0 0
        %722 = vmatprep.subr.bf16.mxu0 0
        %723 = vmatpush1.bf16.msra.mxu0 0
        %724 = vmatprep.subr.bf16.mxu0 0
        %725 = vmatpush1.bf16.msra.mxu0 0
        %726 = vmatprep.subr.bf16.mxu0 0
        %727 = vmatpush1.bf16.msra.mxu0 0
        %728 = vmatprep.subr.bf16.mxu0 0
        %729 = vmatpush1.bf16.msra.mxu0 0
        %730 = vmatprep.subr.bf16.mxu0 0
        %731 = vmatpush1.bf16.msra.mxu0 0
        %732 = vmatprep.subr.bf16.mxu0 0
        %733 = vmatpush1.bf16.msra.mxu0 0
        %734 = vmatprep.subr.bf16.mxu0 0
        %735 = vmatpush1.bf16.msra.mxu0 0
        %736 = vmatprep.subr.bf16.mxu0 0
        %737 = vmatpush1.bf16.msra.mxu0 0
        %738 = vmatprep.subr.bf16.mxu0 0
        %739 = vmatpush1.bf16.msra.mxu0 0
        %740 = vmatprep.subr.bf16.mxu0 0
        %741 = vmatpush1.bf16.msra.mxu0 0
        %742 = vmatprep.subr.bf16.mxu0 0
        %743 = vmatpush1.bf16.msra.mxu0 0
        %744 = vmatprep.mubr.bf16.mxu0 0
        %745 = vmatmul.mubr.bf16.gmra.mrb[0].mxu0 %v707
        %v746 = vpop.f32.mrb[0].mxu0
        %v747 = vadd.f32 %v701, %v746
        %v748 = vpop.f32.mrb[0].mxu0
        %v749 = vpop.f32.mrb[0].mxu0
        %v750 = vpop.f32.mrb[0].mxu0
        %751 = vdwg.mxu0
        %752 = vrot.lane.b32.xlu0 %v353, 108
        %v753 = vpop.permute.xlu0 %752
        %v755 = vsel %vm372, %v753, %v515
        %756 = vrot.lane.b32.xlu0 %v358, 16
        %v757 = vpop.permute.xlu0 %756
        %v759 = vmul.f32 %v353, %v757
        %v760 = vmul.f32 %v755, %v359
        %762 = vrot.lane.b32.xlu0 %v760, 16
        %v763 = vpop.permute.xlu0 %762
        %v765 = vadd.f32 %v759, %v763
        %766 = vrot.lane.b32.xlu0 %v353, 76
        %v767 = vpop.permute.xlu0 %766
        %v769 = vsel %vm372, %v767, %v529
        %770 = vrot.lane.b32.xlu0 %v358, 48
        %v771 = vpop.permute.xlu0 %770
        %v773 = vmul.f32 %v353, %v771
        %v774 = vmul.f32 %v769, %v359
        %776 = vrot.lane.b32.xlu0 %v774, 48
        %v777 = vpop.permute.xlu0 %776
        %v779 = vadd.f32 %v773, %v777
        %v780 = vpack.c.bf16 %v765, %v765
        %v781 = vpack.c.bf16 %v779, %v779
        %783 = vrot.lane.b32.xlu0 %v780, 112
        %v784 = vpop.permute.xlu0 %783
        %786 = vrot.lane.b32.xlu0 %v781, 80
        %v787 = vpop.permute.xlu0 %786
        %v789 = vsel %vm400, %v784, 0
        %v792 = vsel %vm400, %v787, 0
        %794 = vmatprep.subr.bf16.mxu0 0
        %795 = vmatpush1.bf16.xpose.msra.mxu0 %v792
        %796 = vmatprep.subr.bf16.mxu0 0
        %797 = vmatpush1.bf16.xpose.msra.mxu0 0
        %798 = vmatprep.subr.bf16.mxu0 0
        %799 = vmatpush1.bf16.xpose.msra.mxu0 0
        %800 = vmatprep.subr.bf16.mxu0 0
        %801 = vmatpush1.bf16.xpose.msra.mxu0 0
        %802 = vmatprep.subr.bf16.mxu0 0
        %803 = vmatpush1.bf16.xpose.msra.mxu0 0
        %804 = vmatprep.subr.bf16.mxu0 0
        %805 = vmatpush1.bf16.xpose.msra.mxu0 0
        %806 = vmatprep.subr.bf16.mxu0 0
        %807 = vmatpush1.bf16.xpose.msra.mxu0 0
        %808 = vmatprep.subr.bf16.mxu0 0
        %809 = vmatpush1.bf16.xpose.msra.mxu0 0
        %810 = vmatprep.subr.bf16.mxu0 0
        %811 = vmatpush1.bf16.xpose.msra.mxu0 0
        %812 = vmatprep.subr.bf16.mxu0 0
        %813 = vmatpush1.bf16.xpose.msra.mxu0 0
        %814 = vmatprep.subr.bf16.mxu0 0
        %815 = vmatpush1.bf16.xpose.msra.mxu0 0
        %816 = vmatprep.subr.bf16.mxu0 0
        %817 = vmatpush1.bf16.xpose.msra.mxu0 0
        %818 = vmatprep.subr.bf16.mxu0 0
        %819 = vmatpush1.bf16.xpose.msra.mxu0 0
        %820 = vmatprep.subr.bf16.mxu0 0
        %821 = vmatpush1.bf16.xpose.msra.mxu0 0
        %822 = vmatprep.subr.bf16.mxu0 0
        %823 = vmatpush1.bf16.xpose.msra.mxu0 0
        %824 = vmatprep.subr.bf16.mxu0 0
        %825 = vmatpush1.bf16.xpose.msra.mxu0 0
        %826 = vmatprep.mubr.bf16.mxu0 0
        %827 = vmatmul.mubr.bf16.gmra.mrb[0].mxu0 %v789
        %v828 = vpop.f32.mrb[0].mxu0
        %v829 = vadd.f32 0.0, %v828
        %v830 = vpop.f32.mrb[0].mxu0
        %v831 = vpop.f32.mrb[0].mxu0
        %v832 = vpop.f32.mrb[0].mxu0
        %833 = vdwg.mxu0
        %v834 = vmul.f32 %v829, 0.35355338
        %v835 = vsel %vm364, %v834, -1e+30
        %v836 = vsel %vm400, %v835, -inf
        %837 = vmax.xlane.f32.xlu0 %v836
        %v838 = vpop.xlane.xlu0 %837
        %v839 = vsub.f32 %v835, %v838
        %v840 = vmul.f32 %v839, 1.442695
        %v841 = vpow.pop %v840
        %v842 = vsel %vm400, %v841, 0.0
        %843 = vadd.xlane.f32.xlu0 %v842
        %v844 = vpop.xlane.xlu0 %843
        %v845 = vpack.c.bf16 %v841, %v841
        %846 = vrot.lane.b32.xlu0 %v459, 48
        %v847 = vpop.permute.xlu0 %846
        %v849 = vsel %vm400, %v845, 0
        %v852 = vsel %vm466, %v847, 0
        %854 = vmatprep.subr.bf16.mxu0 0
        %855 = vmatpush1.bf16.msra.mxu0 %v852
        %856 = vmatprep.subr.bf16.mxu0 0
        %857 = vmatpush1.bf16.msra.mxu0 0
        %858 = vmatprep.subr.bf16.mxu0 0
        %859 = vmatpush1.bf16.msra.mxu0 0
        %860 = vmatprep.subr.bf16.mxu0 0
        %861 = vmatpush1.bf16.msra.mxu0 0
        %862 = vmatprep.subr.bf16.mxu0 0
        %863 = vmatpush1.bf16.msra.mxu0 0
        %864 = vmatprep.subr.bf16.mxu0 0
        %865 = vmatpush1.bf16.msra.mxu0 0
        %866 = vmatprep.subr.bf16.mxu0 0
        %867 = vmatpush1.bf16.msra.mxu0 0
        %868 = vmatprep.subr.bf16.mxu0 0
        %869 = vmatpush1.bf16.msra.mxu0 0
        %870 = vmatprep.subr.bf16.mxu0 0
        %871 = vmatpush1.bf16.msra.mxu0 0
        %872 = vmatprep.subr.bf16.mxu0 0
        %873 = vmatpush1.bf16.msra.mxu0 0
        %874 = vmatprep.subr.bf16.mxu0 0
        %875 = vmatpush1.bf16.msra.mxu0 0
        %876 = vmatprep.subr.bf16.mxu0 0
        %877 = vmatpush1.bf16.msra.mxu0 0
        %878 = vmatprep.subr.bf16.mxu0 0
        %879 = vmatpush1.bf16.msra.mxu0 0
        %880 = vmatprep.subr.bf16.mxu0 0
        %881 = vmatpush1.bf16.msra.mxu0 0
        %882 = vmatprep.subr.bf16.mxu0 0
        %883 = vmatpush1.bf16.msra.mxu0 0
        %884 = vmatprep.subr.bf16.mxu0 0
        %885 = vmatpush1.bf16.msra.mxu0 0
        %886 = vmatprep.mubr.bf16.mxu0 0
        %887 = vmatmul.mubr.bf16.gmra.mrb[0].mxu0 %v849
        %v888 = vpop.f32.mrb[0].mxu0
        %v889 = vadd.f32 0.0, %v888
        %v890 = vpop.f32.mrb[0].mxu0
        %v891 = vpop.f32.mrb[0].mxu0
        %v892 = vpop.f32.mrb[0].mxu0
        %893 = vdwg.mxu0
        %v894 = vrcp.pop %v844
        %v895 = vmul.f32 %v889, %v894
        %v896 = vpack.c.bf16 %v895, %v895
        %v897 = vld [vmem:[#allocation7 + $0x8] sm:$0xf]
        %v899 = vsel %vm400, %v896, 0
        %v902 = vsel %vm466, %v897, 0
        %904 = vmatprep.subr.bf16.mxu0 0
        %905 = vmatpush1.bf16.msra.mxu0 %v902
        %906 = vmatprep.subr.bf16.mxu0 0
        %907 = vmatpush1.bf16.msra.mxu0 0
        %908 = vmatprep.subr.bf16.mxu0 0
        %909 = vmatpush1.bf16.msra.mxu0 0
        %910 = vmatprep.subr.bf16.mxu0 0
        %911 = vmatpush1.bf16.msra.mxu0 0
        %912 = vmatprep.subr.bf16.mxu0 0
        %913 = vmatpush1.bf16.msra.mxu0 0
        %914 = vmatprep.subr.bf16.mxu0 0
        %915 = vmatpush1.bf16.msra.mxu0 0
        %916 = vmatprep.subr.bf16.mxu0 0
        %917 = vmatpush1.bf16.msra.mxu0 0
        %918 = vmatprep.subr.bf16.mxu0 0
        %919 = vmatpush1.bf16.msra.mxu0 0
        %920 = vmatprep.subr.bf16.mxu0 0
        %921 = vmatpush1.bf16.msra.mxu0 0
        %922 = vmatprep.subr.bf16.mxu0 0
        %923 = vmatpush1.bf16.msra.mxu0 0
        %924 = vmatprep.subr.bf16.mxu0 0
        %925 = vmatpush1.bf16.msra.mxu0 0
        %926 = vmatprep.subr.bf16.mxu0 0
        %927 = vmatpush1.bf16.msra.mxu0 0
        %928 = vmatprep.subr.bf16.mxu0 0
        %929 = vmatpush1.bf16.msra.mxu0 0
        %930 = vmatprep.subr.bf16.mxu0 0
        %931 = vmatpush1.bf16.msra.mxu0 0
        %932 = vmatprep.subr.bf16.mxu0 0
        %933 = vmatpush1.bf16.msra.mxu0 0
        %934 = vmatprep.subr.bf16.mxu0 0
        %935 = vmatpush1.bf16.msra.mxu0 0
        %936 = vmatprep.mubr.bf16.mxu0 0
        %937 = vmatmul.mubr.bf16.gmra.mrb[0].mxu0 %v899
        %v938 = vpop.f32.mrb[0].mxu0
        %v939 = vadd.f32 0.0, %v938
        %v940 = vpop.f32.mrb[0].mxu0
        %v941 = vpop.f32.mrb[0].mxu0
        %v942 = vpop.f32.mrb[0].mxu0
        %943 = vdwg.mxu0
        %v944 = vadd.f32 %v747, %v939
        %v945 = vsel %vm372, %v381, %v753
        %946 = vrot.lane.b32.xlu0 %v358, 24
        %v947 = vpop.permute.xlu0 %946
        %v949 = vmul.f32 %v353, %v947
        %v950 = vmul.f32 %v945, %v359
        %952 = vrot.lane.b32.xlu0 %v950, 24
        %v953 = vpop.permute.xlu0 %952
        %v955 = vadd.f32 %v949, %v953
        %956 = vrot.lane.b32.xlu0 %v353, 68
        %v957 = vpop.permute.xlu0 %956
        %v959 = vsel %vm372, %v957, %v767
        %960 = vrot.lane.b32.xlu0 %v358, 56
        %v961 = vpop.permute.xlu0 %960
        %v963 = vmul.f32 %v353, %v961
        %v964 = vmul.f32 %v959, %v359
        %966 = vrot.lane.b32.xlu0 %v964, 56
        %v967 = vpop.permute.xlu0 %966
        %v969 = vadd.f32 %v963, %v967
        %v970 = vpack.c.bf16 %v955, %v955
        %v971 = vpack.c.bf16 %v969, %v969
        %973 = vrot.lane.b32.xlu0 %v970, 104
        %v974 = vpop.permute.xlu0 %973
        %976 = vrot.lane.b32.xlu0 %v971, 72
        %v977 = vpop.permute.xlu0 %976
        %v979 = vsel %vm400, %v974, 0
        %v982 = vsel %vm400, %v977, 0
        %984 = vmatprep.subr.bf16.mxu0 0
        %985 = vmatpush1.bf16.xpose.msra.mxu0 %v982
        %986 = vmatprep.subr.bf16.mxu0 0
        %987 = vmatpush1.bf16.xpose.msra.mxu0 0
        %988 = vmatprep.subr.bf16.mxu0 0
        %989 = vmatpush1.bf16.xpose.msra.mxu0 0
        %990 = vmatprep.subr.bf16.mxu0 0
        %991 = vmatpush1.bf16.xpose.msra.mxu0 0
        %992 = vmatprep.subr.bf16.mxu0 0
        %993 = vmatpush1.bf16.xpose.msra.mxu0 0
        %994 = vmatprep.subr.bf16.mxu0 0
        %995 = vmatpush1.bf16.xpose.msra.mxu0 0
        %996 = vmatprep.subr.bf16.mxu0 0
        %997 = vmatpush1.bf16.xpose.msra.mxu0 0
        %998 = vmatprep.subr.bf16.mxu0 0
        %999 = vmatpush1.bf16.xpose.msra.mxu0 0
        %1000 = vmatprep.subr.bf16.mxu0 0
        %1001 = vmatpush1.bf16.xpose.msra.mxu0 0
        %1002 = vmatprep.subr.bf16.mxu0 0
        %1003 = vmatpush1.bf16.xpose.msra.mxu0 0
        %1004 = vmatprep.subr.bf16.mxu0 0
        %1005 = vmatpush1.bf16.xpose.msra.mxu0 0
        %1006 = vmatprep.subr.bf16.mxu0 0
        %1007 = vmatpush1.bf16.xpose.msra.mxu0 0
        %1008 = vmatprep.subr.bf16.mxu0 0
        %1009 = vmatpush1.bf16.xpose.msra.mxu0 0
        %1010 = vmatprep.subr.bf16.mxu0 0
        %1011 = vmatpush1.bf16.xpose.msra.mxu0 0
        %1012 = vmatprep.subr.bf16.mxu0 0
        %1013 = vmatpush1.bf16.xpose.msra.mxu0 0
        %1014 = vmatprep.subr.bf16.mxu0 0
        %1015 = vmatpush1.bf16.xpose.msra.mxu0 0
        %1016 = vmatprep.mubr.bf16.mxu0 0
        %1017 = vmatmul.mubr.bf16.gmra.mrb[0].mxu0 %v979
        %v1018 = vpop.f32.mrb[0].mxu0
        %v1019 = vadd.f32 0.0, %v1018
        %v1020 = vpop.f32.mrb[0].mxu0
        %v1021 = vpop.f32.mrb[0].mxu0
        %v1022 = vpop.f32.mrb[0].mxu0
        %1023 = vdwg.mxu0
        %v1024 = vmul.f32 %v1019, 0.35355338
        %v1025 = vsel %vm364, %v1024, -1e+30
        %v1026 = vsel %vm400, %v1025, -inf
        %1027 = vmax.xlane.f32.xlu0 %v1026
        %v1028 = vpop.xlane.xlu0 %1027
        %v1029 = vsub.f32 %v1025, %v1028
        %v1030 = vmul.f32 %v1029, 1.442695
        %v1031 = vpow.pop %v1030
        %v1032 = vsel %vm400, %v1031, 0.0
        %1033 = vadd.xlane.f32.xlu0 %v1032
        %v1034 = vpop.xlane.xlu0 %1033
        %v1035 = vpack.c.bf16 %v1031, %v1031
        %1036 = vrot.lane.b32.xlu0 %v459, 40
        %v1037 = vpop.permute.xlu0 %1036
        %v1039 = vsel %vm400, %v1035, 0
        %v1042 = vsel %vm466, %v1037, 0
        %1044 = vmatprep.subr.bf16.mxu0 0
        %1045 = vmatpush1.bf16.msra.mxu0 %v1042
        %1046 = vmatprep.subr.bf16.mxu0 0
        %1047 = vmatpush1.bf16.msra.mxu0 0
        %1048 = vmatprep.subr.bf16.mxu0 0
        %1049 = vmatpush1.bf16.msra.mxu0 0
        %1050 = vmatprep.subr.bf16.mxu0 0
        %1051 = vmatpush1.bf16.msra.mxu0 0
        %1052 = vmatprep.subr.bf16.mxu0 0
        %1053 = vmatpush1.bf16.msra.mxu0 0
        %1054 = vmatprep.subr.bf16.mxu0 0
        %1055 = vmatpush1.bf16.msra.mxu0 0
        %1056 = vmatprep.subr.bf16.mxu0 0
        %1057 = vmatpush1.bf16.msra.mxu0 0
        %1058 = vmatprep.subr.bf16.mxu0 0
        %1059 = vmatpush1.bf16.msra.mxu0 0
        %1060 = vmatprep.subr.bf16.mxu0 0
        %1061 = vmatpush1.bf16.msra.mxu0 0
        %1062 = vmatprep.subr.bf16.mxu0 0
        %1063 = vmatpush1.bf16.msra.mxu0 0
        %1064 = vmatprep.subr.bf16.mxu0 0
        %1065 = vmatpush1.bf16.msra.mxu0 0
        %1066 = vmatprep.subr.bf16.mxu0 0
        %1067 = vmatpush1.bf16.msra.mxu0 0
        %1068 = vmatprep.subr.bf16.mxu0 0
        %1069 = vmatpush1.bf16.msra.mxu0 0
        %1070 = vmatprep.subr.bf16.mxu0 0
        %1071 = vmatpush1.bf16.msra.mxu0 0
        %1072 = vmatprep.subr.bf16.mxu0 0
        %1073 = vmatpush1.bf16.msra.mxu0 0
        %1074 = vmatprep.subr.bf16.mxu0 0
        %1075 = vmatpush1.bf16.msra.mxu0 0
        %1076 = vmatprep.mubr.bf16.mxu0 0
        %1077 = vmatmul.mubr.bf16.gmra.mrb[0].mxu0 %v1039
        %v1078 = vpop.f32.mrb[0].mxu0
        %v1079 = vadd.f32 0.0, %v1078
        %v1080 = vpop.f32.mrb[0].mxu0
        %v1081 = vpop.f32.mrb[0].mxu0
        %v1082 = vpop.f32.mrb[0].mxu0
        %1083 = vdwg.mxu0
        %v1084 = vrcp.pop %v1034
        %v1085 = vmul.f32 %v1079, %v1084
        %v1086 = vpack.c.bf16 %v1085, %v1085
        %v1087 = vld [vmem:[#allocation7 + $0xc] sm:$0xf]
        %v1089 = vsel %vm400, %v1086, 0
        %v1092 = vsel %vm466, %v1087, 0
        %1094 = vmatprep.subr.bf16.mxu0 0
        %1095 = vmatpush1.bf16.msra.mxu0 %v1092
        %1096 = vmatprep.subr.bf16.mxu0 0
        %1097 = vmatpush1.bf16.msra.mxu0 0
        %1098 = vmatprep.subr.bf16.mxu0 0
        %1099 = vmatpush1.bf16.msra.mxu0 0
        %1100 = vmatprep.subr.bf16.mxu0 0
        %1101 = vmatpush1.bf16.msra.mxu0 0
        %1102 = vmatprep.subr.bf16.mxu0 0
        %1103 = vmatpush1.bf16.msra.mxu0 0
        %1104 = vmatprep.subr.bf16.mxu0 0
        %1105 = vmatpush1.bf16.msra.mxu0 0
        %1106 = vmatprep.subr.bf16.mxu0 0
        %1107 = vmatpush1.bf16.msra.mxu0 0
        %1108 = vmatprep.subr.bf16.mxu0 0
        %1109 = vmatpush1.bf16.msra.mxu0 0
        %1110 = vmatprep.subr.bf16.mxu0 0
        %1111 = vmatpush1.bf16.msra.mxu0 0
        %1112 = vmatprep.subr.bf16.mxu0 0
        %1113 = vmatpush1.bf16.msra.mxu0 0
        %1114 = vmatprep.subr.bf16.mxu0 0
        %1115 = vmatpush1.bf16.msra.mxu0 0
        %1116 = vmatprep.subr.bf16.mxu0 0
        %1117 = vmatpush1.bf16.msra.mxu0 0
        %1118 = vmatprep.subr.bf16.mxu0 0
        %1119 = vmatpush1.bf16.msra.mxu0 0
        %1120 = vmatprep.subr.bf16.mxu0 0
        %1121 = vmatpush1.bf16.msra.mxu0 0
        %1122 = vmatprep.subr.bf16.mxu0 0
        %1123 = vmatpush1.bf16.msra.mxu0 0
        %1124 = vmatprep.subr.bf16.mxu0 0
        %1125 = vmatpush1.bf16.msra.mxu0 0
        %1126 = vmatprep.mubr.bf16.mxu0 0
        %1127 = vmatmul.mubr.bf16.gmra.mrb[0].mxu0 %v1089
        %v1128 = vpop.f32.mrb[0].mxu0
        %v1129 = vadd.f32 0.0, %v1128
        %v1130 = vpop.f32.mrb[0].mxu0
        %v1131 = vpop.f32.mrb[0].mxu0
        %v1132 = vpop.f32.mrb[0].mxu0
        %1133 = vdwg.mxu0
        %v1134 = vadd.f32 %v944, %v1129
        %v1135 = vld [vmem:[%s3] sm:$0x1]
        %v1137 = vlaneseq
        %v1138 = vshrl.u32 %v1137, 7
        %v1139 = vsub.s32 0, %v1138
        %v1140 = vrot.slane %v1135, %v1139
        %v1142 = vadd.f32 %v1134, %v1140
        %1143 = vst.msk [vmem:[%s295] sm:$0xff] %vm314, %v1142
        %s1144 = sand.u32 %s163, 1
        %s1145 = scalar_lea.sflag [#allocation4], %s1144
        %s1146 = sand.u32 %s163, 1
        %s1147 = smul.addr %s1146, 8
        %s1148 = scalar_lea.vmem [#allocation8], %s1147
        // Predicated region
        $region57: #{tpu_custom_call.1} parent=43 // pred_check
          %p1149 = pneg %p173
        $region58: #{tpu_custom_call.1} parent=43 // pred_check_branch
          %1151 = sbr.rel (%p1149) target = $region60
        $region59: #{tpu_custom_call.1} parent=43 // pred_region
          %s1153 = ssub.s32 128, 128
          %1154 = vsyncadd %s1145, %s1153
          %s1155 = smul.addr %s24, 128
          %s1156 = scalar_lea.hbm %s6, %s1155
          %s1158 = sshll.u32 %s1148, 4
          %s1159 = int_to_ptr.vmem [resolvable:$true] %s1158
          %1161 = dma.vmem_to_hbm [thread:$0]  %s1159, 128, %s1156, %s1145
        $region60: #{tpu_custom_call.1} parent=43 // pred_fallthru
          _
      $region44: #{tpu_custom_call.1} parent=5 // pred_fallthru
        _
      %p1162 = scmp.le.s32.totalorder 2, %s19
      // Predicated region
      $region61: #{tpu_custom_call.1} parent=5 // pred_check
        %p1163 = pneg %p1162
      $region62: #{tpu_custom_call.1} parent=5 // pred_check_branch
        %1165 = sbr.rel (%p1163) target = $region64
      $region63: #{tpu_custom_call.1} parent=5 // pred_region
        %s1166 = ssub.s32 %s19, 2
        // Predicated region
        $region65: #{tpu_custom_call.1} parent=63 // pred_check
          %p1167 = pneg %p179
        $region66: #{tpu_custom_call.1} parent=63 // pred_check_branch
          %1169 = sbr.rel (%p1167) target = $region68
        $region67: #{tpu_custom_call.1} parent=63 // pred_region
          %s1170 = sand.u32 %s164, 1
          %s1171 = scalar_lea.sflag [#allocation4], %s1170
          %s1172 = sand.u32 %s164, 1
          %s1173 = smul.addr %s1172, 8
          %s1174 = scalar_lea.vmem [#allocation8], %s1173
          %1175 = dma.done %s1171, 128
        $region68: #{tpu_custom_call.1} parent=63 // pred_fallthru
          _
      $region64: #{tpu_custom_call.1} parent=5 // pred_fallthru
        _
    $region6: #{tpu_custom_call.1} parent=1 // loop_footer
      %s23 = sadd.s32 1, %s19
    $region7: #{tpu_custom_call.1} parent=1 // loop_footer_branch
      %18 = sbr.rel target = $region3
    $region8: #{tpu_custom_call.1} parent=1 // loop_exit
      _
    %1176 = vsyncpa [#allocation3], 1
    %s1177 = scalar_lea.sflag [#allocation3], 1
    %1178 = vsyncpa %s1177, 1
    %1179 = vsyncpa [#allocation6], 1
    %1180 = vsyncpa [#allocation4], 1
    %s1181 = scalar_lea.sflag [#allocation4], 1
    %1182 = vsyncpa %s1181, 1

</llo_original>
